<compile_context>
chip_gen: v7x
topology: tpu7x:2x2x1
jax: 0.10.0
libtpu: 0.0.40
codegen_flags: <defaults>
</compile_context>

<pallas_src>
import functools

import jax
import jax.numpy as jnp
from jax import lax
from jax.experimental import pallas as pl
from jax.experimental.pallas import tpu as pltpu


# ----------------------------------------------------------------------------
# Config
# ----------------------------------------------------------------------------

_TM = 256                      # target M tile for conv GEMMs
_TN = 256                      # target N tile for conv GEMMs (v6e-friendly)
_VMEM_LIMIT = 32 * 1024 * 1024  # explicit scoped-VMEM budget (safe on v5e/v6e/v7x)
_COMPUTE_DTYPE = jnp.bfloat16   # MXU input dtype; accumulation + epilogues in f32


def _round_up(x, m):
    return (x + m - 1) // m * m


# ----------------------------------------------------------------------------
# Fused conv GEMM kernel:  o = relu?((patches @ w) * bn_scale + bn_shift)
# ----------------------------------------------------------------------------

def _gemm_bn_act_kernel(x_ref, w_ref, scale_ref, shift_ref, o_ref, *, relu):
    acc = jnp.dot(x_ref[...], w_ref[...], preferred_element_type=jnp.float32)
    y = acc * scale_ref[...] + shift_ref[...]          # folded inference BN (f32)
    if relu:
        y = jnp.maximum(y, 0.0)
    o_ref[...] = y.astype(o_ref.dtype)


def gemm_bn_act(x, w, scale, shift, *, relu, out_dtype):
    """Tiled GEMM with fused BN affine + ReLU epilogue.

    x: (M, K) activations (bf16), w: (K, N) weights (bf16, K % 128 == 0),
    scale/shift: (1, N) f32. Grid tiles M and N; K stays resident per step.
    """
    M, K = x.shape
    Kw, N = w.shape
    assert K == Kw and K % 128 == 0

    tm = min(_TM, _round_up(M, 8))
    Mp = _round_up(M, tm)
    if N % _TN == 0:
        tn = _TN
    elif N % 128 == 0:
        tn = min(N, _TN)
    else:
        tn = N                                          # full-dim block (legal)

    if Mp > M:
        x = jnp.pad(x, ((0, Mp - M), (0, 0)))

    grid = (Mp // tm, N // tn)
    out = pl.pallas_call(
        functools.partial(_gemm_bn_act_kernel, relu=relu),
        out_shape=jax.ShapeDtypeStruct((Mp, N), out_dtype),
        grid=grid,
        in_specs=[pl.BlockSpec((tm, K), lambda i, j: (i, 0)),
                  pl.BlockSpec((K, tn), lambda i, j: (0, j)),
                  pl.BlockSpec((1, tn), lambda i, j: (0, j)),
                  pl.BlockSpec((1, tn), lambda i, j: (0, j))],
        out_specs=pl.BlockSpec((tm, tn), lambda i, j: (i, j)),
        compiler_params=pltpu.CompilerParams(
            dimension_semantics=("parallel", "parallel"),
            vmem_limit_bytes=_VMEM_LIMIT),
    )(x, w, scale, shift)
    return out[:M] if Mp > M else out


# ----------------------------------------------------------------------------
# Fused tail kernel: global avg pool -> explicit Euler SDE -> fc (lane-dense)
# ----------------------------------------------------------------------------

def _tail_kernel(x_ref, winy_ref, temb_ref, wh_ref, bh_ref, wout_ref, bout_ref,
                 fcw_ref, fcb_ref, o_ref, *, num_steps, dt, num_hidden, unroll):
    cd = winy_ref.dtype

    # global average pool over spatial positions: (Bp, S, C) -> (Bp, C), f32
    z0 = jnp.mean(x_ref[...].astype(jnp.float32), axis=1)

    def euler_step(n, y):
        # drift f(t, y): the sin/cos time-embedding contribution
        # sin(t)*Win[0] + cos(t)*Win[1] + b_in is precomputed per step in temb.
        z = jnp.dot(y.astype(cd), winy_ref[...],
                    preferred_element_type=jnp.float32)
        z = z + temb_ref[pl.ds(n, 1), :]
        z = jnp.maximum(z, 0.0)
        for l in range(num_hidden):                    # static unroll over layers
            z = jnp.dot(z.astype(cd), wh_ref[l],
                        preferred_element_type=jnp.float32) + bh_ref[l]
            z = jnp.maximum(z, 0.0)
        z = jnp.dot(z.astype(cd), wout_ref[...],
                    preferred_element_type=jnp.float32) + bout_ref[...]
        z = jnp.tanh(z)
        return y + dt * z                              # f32 state update

    # partially unrolled Euler loop (diffusion g == 0 for noise_setting='none')
    n_major = num_steps // unroll
    rem = num_steps - n_major * unroll

    def major(i, y):
        base = i * unroll
        for j in range(unroll):
            y = euler_step(base + j, y)
        return y

    y = lax.fori_loop(0, n_major, major, z0)
    for j in range(rem):
        y = euler_step(n_major * unroll + j, y)

    # final classifier; output slab is lane-dense (classes padded to 128 mult)
    logits = jnp.dot(y.astype(cd), fcw_ref[...],
                     preferred_element_type=jnp.float32) + fcb_ref[...]
    o_ref[...] = logits.astype(o_ref.dtype)


def pool_sde_fc(x_nhwc, sde_p, fc_p, *, dt, num_classes):
    B, H, W, C = x_nhwc.shape
    Bp = max(_round_up(B, 8), 8)
    x = x_nhwc.reshape(B, H * W, C)
    if Bp > B:
        # pad batch to a full sublane group so the per-step MXU pushes stay
        # dense; padded rows are discarded after the kernel.
        x = jnp.pad(x, ((0, Bp - B), (0, 0), (0, 0)))

    num_steps = sde_p["temb"].shape[0]
    num_hidden = sde_p["wh"].shape[0]
    nclsp = fc_p["w"].shape[1]

    kern = functools.partial(_tail_kernel, num_steps=num_steps, dt=float(dt),
                             num_hidden=num_hidden, unroll=3)
    args = (x, sde_p["winy"], sde_p["temb"], sde_p["wh"], sde_p["bh"],
            sde_p["wout"], sde_p["bout"], fc_p["w"], fc_p["b"])

    def fullspec(shape):
        nd = len(shape)
        return pl.BlockSpec(shape, lambda i, _n=nd: (0,) * _n)

    out = pl.pallas_call(
        kern,
        out_shape=jax.ShapeDtypeStruct((Bp, nclsp), jnp.float32),
        grid=(1,),
        in_specs=[fullspec(a.shape) for a in args],
        out_specs=fullspec((Bp, nclsp)),
        compiler_params=pltpu.CompilerParams(
            dimension_semantics=("arbitrary",),
            vmem_limit_bytes=_VMEM_LIMIT),
    )(*args)
    return out[:B, :num_classes]


# ----------------------------------------------------------------------------
# Plain-JAX glue: im2col patch extraction, maxpool
# ----------------------------------------------------------------------------

def im2col(x_nhwc, ksize, stride, pad, k_pad_to=None):
    # TODO(synk): patch extraction still materializes the k*k-expanded matrix
    # in HBM; moving it in-kernel (tap accumulation over a BlockSpec window)
    # would remove that traffic once batch / spatial sizes grow.
    B, H, W, C = x_nhwc.shape
    Ho = (H + 2 * pad - ksize) // stride + 1
    Wo = (W + 2 * pad - ksize) // stride + 1
    xp = jnp.pad(x_nhwc, ((0, 0), (pad, pad), (pad, pad), (0, 0)))
    cols = []
    for di in range(ksize):
        for dj in range(ksize):
            cols.append(xp[:, di:di + stride * (Ho - 1) + 1:stride,
                           dj:dj + stride * (Wo - 1) + 1:stride, :])
    patches = jnp.stack(cols, axis=3)                   # (B, Ho, Wo, k*k, C)
    cols2d = patches.reshape(B * Ho * Wo, ksize * ksize * C)
    kk = ksize * ksize * C
    if k_pad_to is not None and k_pad_to > kk:
        # zero-pad the contraction dim to a multiple of 128 (lane-dense tiles)
        cols2d = jnp.pad(cols2d, ((0, 0), (0, k_pad_to - kk)))
    return cols2d, (B, Ho, Wo)


def conv_bn_relu(x_nhwc, p, *, ksize, stride, pad):
    """Conv (no bias) + inference BatchNorm + ReLU as one tiled Pallas GEMM."""
    cols, (B, Ho, Wo) = im2col(x_nhwc, ksize, stride, pad,
                               k_pad_to=p["w"].shape[0])
    cout = p["scale"].shape[1]
    y = gemm_bn_act(cols, p["w"], p["scale"], p["shift"], relu=True,
                    out_dtype=x_nhwc.dtype)
    return y.reshape(B, Ho, Wo, cout)


def max_pool_3x3_s2_p1(x_nhwc):
    # TODO(synk): maxpool kept in plain JAX (lax.reduce_window) - tiny
    # reduction off the hot path; a Pallas version needs strided window
    # slicing fused into the conv epilogue.
    return lax.reduce_window(x_nhwc, jnp.asarray(-jnp.inf, dtype=x_nhwc.dtype),
                             lax.max,
                             window_dimensions=(1, 3, 3, 1),
                             window_strides=(1, 2, 2, 1),
                             padding=((0, 0), (1, 1), (1, 1), (0, 0)))


# ----------------------------------------------------------------------------
# Parameters: init (matches the PyTorch module structure) + one-time prep
# ----------------------------------------------------------------------------

def init_params(key, *, layers=(1, 1), num_classes=16, inplanes=64):
    keys = iter(jax.random.split(key, 32))

    def nrm(shape, s=0.05):
        return jax.random.normal(next(keys), shape, jnp.float32) * s

    def uni(shape, lo=0.5, hi=1.5):
        return jax.random.uniform(next(keys), shape, jnp.float32, lo, hi)

    def bn(c):
        return dict(gamma=uni((c,)), beta=nrm((c,), 0.1),
                    mean=nrm((c,), 0.1), var=uni((c,)))

    params = {"conv1_w": nrm((7, 7, 3, inplanes)), "bn1": bn(inplanes)}

    blocks = []
    planes = inplanes
    for _ in range(layers[0]):
        blocks.append({"w": nrm((3, 3, planes, 2 * planes)), "bn": bn(2 * planes)})
        planes *= 2
    params["blocks"] = blocks

    D = planes                                  # feature_dim = inplanes * 2**layers[0]
    L = layers[1]
    params["sde"] = dict(
        lin_in_wt=nrm((D + 2, D)), lin_in_b=nrm((D,), 0.1),
        hidden_wt=nrm((L, D, D)), hidden_b=nrm((L, D), 0.1),
        lin_out_wt=nrm((D, D)), lin_out_b=nrm((D,), 0.1),
    )
    params["fc_w"] = nrm((D, num_classes))
    params["fc_b"] = nrm((num_classes,), 0.1)
    return params


def prepare_params(params, timesteps, dt, *, eps=1e-5, compute_dtype=_COMPUTE_DTYPE):
    """One-time parameter packing: BN folding, K/N padding, bf16 casts,
    per-step time-embedding precompute.  All casts are hoisted here so the
    forward pass issues no per-call .astype() ops on the weights."""
    cd = compute_dtype

    def conv_prep(w_kkio, bn):
        kh, kw, cin, cout = w_kkio.shape
        k2c = kh * kw * cin
        kp = _round_up(k2c, 128)
        wm = w_kkio.reshape(k2c, cout)
        if kp > k2c:
            wm = jnp.pad(wm, ((0, kp - k2c), (0, 0)))
        scale = bn["gamma"] / jnp.sqrt(bn["var"] + eps)
        shift = bn["beta"] - bn["mean"] * scale
        return dict(w=wm.astype(cd),
                    scale=scale.reshape(1, cout).astype(jnp.float32),
                    shift=shift.reshape(1, cout).astype(jnp.float32))

    prep = {"stem": conv_prep(params["conv1_w"], params["bn1"]),
            "blocks": [conv_prep(b["w"], b["bn"]) for b in params["blocks"]]}

    # SDE drift net.  torchsde euler with fixed dt => num_steps uniform Euler
    # steps over [t0, t1]; requires concrete timesteps and dt | (t1 - t0).
    sde = params["sde"]
    D = sde["lin_in_wt"].shape[1]
    t0 = float(timesteps[0])
    t1 = float(timesteps[-1])
    num_steps = int(round((t1 - t0) / dt))
    assert abs(num_steps * dt - (t1 - t0)) < 1e-5, "dt must divide the ts interval"

    tvals = t0 + dt * jnp.arange(num_steps, dtype=jnp.float32)
    wt = sde["lin_in_wt"].astype(jnp.float32)           # rows 0,1 = sin,cos weights
    temb = (jnp.sin(tvals)[:, None] * wt[0][None, :]
            + jnp.cos(tvals)[:, None] * wt[1][None, :]
            + sde["lin_in_b"][None, :].astype(jnp.float32))   # (num_steps, D)
    L = sde["hidden_wt"].shape[0]
    prep["sde"] = dict(
        winy=wt[2:].astype(cd),                          # (D, D)
        temb=temb.astype(jnp.float32),                   # (num_steps, D)
        wh=sde["hidden_wt"].astype(cd),                  # (L, D, D)
        bh=sde["hidden_b"].reshape(L, 1, D).astype(jnp.float32),
        wout=sde["lin_out_wt"].astype(cd),
        bout=sde["lin_out_b"].reshape(1, D).astype(jnp.float32),
    )

    ncls = params["fc_w"].shape[1]
    nclsp = _round_up(ncls, 128)                         # lane-dense logits slab
    fcw = params["fc_w"]
    fcb = params["fc_b"].reshape(1, ncls)
    if nclsp > ncls:
        fcw = jnp.pad(fcw, ((0, 0), (0, nclsp - ncls)))
        fcb = jnp.pad(fcb, ((0, 0), (0, nclsp - ncls)))
    prep["fc"] = dict(w=fcw.astype(cd), b=fcb.astype(jnp.float32))
    return prep


# ----------------------------------------------------------------------------
# Forward pass
# ----------------------------------------------------------------------------

def sde_net_forward(x_nchw, prep, *, dt, num_classes):
    cd = prep["stem"]["w"].dtype
    x = jnp.transpose(x_nchw, (0, 2, 3, 1)).astype(cd)   # NCHW -> NHWC, bf16

    # stem: conv1 -> bn1 -> relu -> maxpool (ReLU fused into GEMM epilogue)
    x = conv_bn_relu(x, prep["stem"], ksize=7, stride=2, pad=3)
    x = max_pool_3x3_s2_p1(x)

    # blocks: conv -> bn -> maxpool -> relu
    # (ReLU is monotone so ReLU(maxpool(x)) == maxpool(ReLU(x)); fused in GEMM)
    for blk in prep["blocks"]:
        x = conv_bn_relu(x, blk, ksize=3, stride=1, pad=1)
        x = max_pool_3x3_s2_p1(x)

    # fused tail: global avg pool -> 90-step Euler SDE -> fc, single kernel
    return pool_sde_fc(x, prep["sde"], prep["fc"], dt=dt, num_classes=num_classes)


if __name__ == "__main__":
    key = jax.random.PRNGKey(0)
    pkey, xkey = jax.random.split(key)

    # Small configuration: layers=[1,1] -> feature_dim = 64 * 2 = 128, 16 classes
    num_classes = 16
    params = init_params(pkey, layers=(1, 1), num_classes=num_classes, inplanes=64)
    x = jax.random.normal(xkey, (2, 3, 16, 16), jnp.float32)      # NCHW input

    timesteps = jnp.arange(0, 10, dtype=jnp.float32)              # torch.arange(0,10)
    dt = 0.1
    prep = prepare_params(params, timesteps, dt)

    fwd = jax.jit(functools.partial(sde_net_forward, dt=dt, num_classes=num_classes))
    out = fwd(x, prep)
    out = jax.block_until_ready(out)

    assert out.shape == (2, num_classes)
    assert bool(jnp.all(jnp.isfinite(out)))
    print("KERNEL_OK")
</pallas_src>

<mosaic_0001>
module attributes {stable_mosaic.version = 11 : i64} {
  func.func @_gemm_bn_act_kernel(%arg0: i32, %arg1: i32, %arg2: memref<128x256xbf16, #tpu.memory_space<vmem>>, %arg3: memref<256x64xbf16, #tpu.memory_space<vmem>>, %arg4: memref<1x64xf32, #tpu.memory_space<vmem>>, %arg5: memref<1x64xf32, #tpu.memory_space<vmem>>, %arg6: memref<128x64xbf16, #tpu.memory_space<vmem>>) attributes {dimension_semantics = [#tpu.dimension_semantics<parallel>, #tpu.dimension_semantics<parallel>], iteration_bounds = array<i64: 1, 1>, scalar_prefetch = 0 : i64, scratch_operands = 0 : i64, tpu.core_type = #tpu.core_type<tc>, window_params = [{transform_indices = @transform_0, window_bounds = array<i64: 128, 256>}, {transform_indices = @transform_1, window_bounds = array<i64: 256, 64>}, {transform_indices = @transform_2, window_bounds = array<i64: 1, 64>}, {transform_indices = @transform_3, window_bounds = array<i64: 1, 64>}, {transform_indices = @transform_4, window_bounds = array<i64: 128, 64>}]} {
    %c0 = arith.constant 0 : index
    %c0_0 = arith.constant 0 : index
    %0 = vector.load %arg2[%c0, %c0_0] : memref<128x256xbf16, #tpu.memory_space<vmem>>, vector<128x256xbf16>
    %c0_1 = arith.constant 0 : index
    %c0_2 = arith.constant 0 : index
    %1 = vector.load %arg3[%c0_1, %c0_2] : memref<256x64xbf16, #tpu.memory_space<vmem>>, vector<256x64xbf16>
    %cst = arith.constant dense<0.000000e+00> : vector<128x64xf32>
    %2 = tpu.matmul %0, %1, %cst {dimension_numbers = #tpu.dot_dimension_numbers<[1], [0], [0], [1], [0, 0, 1, 1], [], []>} : vector<128x256xbf16>, vector<256x64xbf16>, vector<128x64xf32> -> vector<128x64xf32>
    %c0_3 = arith.constant 0 : index
    %c0_4 = arith.constant 0 : index
    %3 = vector.load %arg4[%c0_3, %c0_4] : memref<1x64xf32, #tpu.memory_space<vmem>>, vector<1x64xf32>
    %4 = vector.broadcast %3 : vector<1x64xf32> to vector<128x64xf32>
    %5 = arith.mulf %2, %4 : vector<128x64xf32>
    %c0_5 = arith.constant 0 : index
    %c0_6 = arith.constant 0 : index
    %6 = vector.load %arg5[%c0_5, %c0_6] : memref<1x64xf32, #tpu.memory_space<vmem>>, vector<1x64xf32>
    %7 = vector.broadcast %6 : vector<1x64xf32> to vector<128x64xf32>
    %8 = arith.addf %5, %7 : vector<128x64xf32>
    %cst_7 = arith.constant 0.000000e+00 : f32
    %9 = vector.broadcast %cst_7 : f32 to vector<128x64xf32>
    %10 = arith.maximumf %8, %9 : vector<128x64xf32>
    %11 = arith.truncf %10 : vector<128x64xf32> to vector<128x64xbf16>
    %c0_8 = arith.constant 0 : index
    %c0_9 = arith.constant 0 : index
    %12 = vector.load %arg6[%c0_8, %c0_9] : memref<128x64xbf16, #tpu.memory_space<vmem>>, vector<128x64xbf16>
    tpu.vector_store %arg6[%c0_8, %c0_9], %11 {strides = array<i32>} : memref<128x64xbf16, #tpu.memory_space<vmem>>, vector<128x64xbf16>,
    return
  }
  func.func @transform_0(%arg0: i32, %arg1: i32) -> (i32, i32) {
    %c0_i32 = arith.constant 0 : i32
    %c0_i32_0 = arith.constant 0 : i32
    return %arg0, %c0_i32 : i32, i32
  }
  func.func @transform_1(%arg0: i32, %arg1: i32) -> (i32, i32) {
    %c0_i32 = arith.constant 0 : i32
    %c0_i32_0 = arith.constant 0 : i32
    return %c0_i32, %arg1 : i32, i32
  }
  func.func @transform_2(%arg0: i32, %arg1: i32) -> (i32, i32) {
    %c0_i32 = arith.constant 0 : i32
    %c0_i32_0 = arith.constant 0 : i32
    return %c0_i32, %arg1 : i32, i32
  }
  func.func @transform_3(%arg0: i32, %arg1: i32) -> (i32, i32) {
    %c0_i32 = arith.constant 0 : i32
    %c0_i32_0 = arith.constant 0 : i32
    return %c0_i32, %arg1 : i32, i32
  }
  func.func @transform_4(%arg0: i32, %arg1: i32) -> (i32, i32) {
    %c0_i32 = arith.constant 0 : i32
    return %arg0, %arg1 : i32, i32
  }
}

module attributes {stable_mosaic.version = 11 : i64} {
  func.func @_gemm_bn_act_kernel(%arg0: i32, %arg1: i32, %arg2: memref<32x640xbf16, #tpu.memory_space<vmem>>, %arg3: memref<640x128xbf16, #tpu.memory_space<vmem>>, %arg4: memref<1x128xf32, #tpu.memory_space<vmem>>, %arg5: memref<1x128xf32, #tpu.memory_space<vmem>>, %arg6: memref<32x128xbf16, #tpu.memory_space<vmem>>) attributes {dimension_semantics = [#tpu.dimension_semantics<parallel>, #tpu.dimension_semantics<parallel>], iteration_bounds = array<i64: 1, 1>, scalar_prefetch = 0 : i64, scratch_operands = 0 : i64, tpu.core_type = #tpu.core_type<tc>, window_params = [{transform_indices = @transform_0, window_bounds = array<i64: 32, 640>}, {transform_indices = @transform_1, window_bounds = array<i64: 640, 128>}, {transform_indices = @transform_2, window_bounds = array<i64: 1, 128>}, {transform_indices = @transform_3, window_bounds = array<i64: 1, 128>}, {transform_indices = @transform_4, window_bounds = array<i64: 32, 128>}]} {
    %c0 = arith.constant 0 : index
    %c0_0 = arith.constant 0 : index
    %0 = vector.load %arg2[%c0, %c0_0] : memref<32x640xbf16, #tpu.memory_space<vmem>>, vector<32x640xbf16>
    %c0_1 = arith.constant 0 : index
    %c0_2 = arith.constant 0 : index
    %1 = vector.load %arg3[%c0_1, %c0_2] : memref<640x128xbf16, #tpu.memory_space<vmem>>, vector<640x128xbf16>
    %cst = arith.constant dense<0.000000e+00> : vector<32x128xf32>
    %2 = tpu.matmul %0, %1, %cst {dimension_numbers = #tpu.dot_dimension_numbers<[1], [0], [0], [1], [0, 0, 1, 1], [], []>} : vector<32x640xbf16>, vector<640x128xbf16>, vector<32x128xf32> -> vector<32x128xf32>
    %c0_3 = arith.constant 0 : index
    %c0_4 = arith.constant 0 : index
    %3 = vector.load %arg4[%c0_3, %c0_4] : memref<1x128xf32, #tpu.memory_space<vmem>>, vector<1x128xf32>
    %4 = vector.broadcast %3 : vector<1x128xf32> to vector<32x128xf32>
    %5 = arith.mulf %2, %4 : vector<32x128xf32>
    %c0_5 = arith.constant 0 : index
    %c0_6 = arith.constant 0 : index
    %6 = vector.load %arg5[%c0_5, %c0_6] : memref<1x128xf32, #tpu.memory_space<vmem>>, vector<1x128xf32>
    %7 = vector.broadcast %6 : vector<1x128xf32> to vector<32x128xf32>
    %8 = arith.addf %5, %7 : vector<32x128xf32>
    %cst_7 = arith.constant 0.000000e+00 : f32
    %9 = vector.broadcast %cst_7 : f32 to vector<32x128xf32>
    %10 = arith.maximumf %8, %9 : vector<32x128xf32>
    %11 = arith.truncf %10 : vector<32x128xf32> to vector<32x128xbf16>
    %c0_8 = arith.constant 0 : index
    %c0_9 = arith.constant 0 : index
    %12 = vector.load %arg6[%c0_8, %c0_9] : memref<32x128xbf16, #tpu.memory_space<vmem>>, vector<32x128xbf16>
    tpu.vector_store %arg6[%c0_8, %c0_9], %11 {strides = array<i32>} : memref<32x128xbf16, #tpu.memory_space<vmem>>, vector<32x128xbf16>,
    return
  }
  func.func @transform_0(%arg0: i32, %arg1: i32) -> (i32, i32) {
    %c0_i32 = arith.constant 0 : i32
    %c0_i32_0 = arith.constant 0 : i32
    return %arg0, %c0_i32 : i32, i32
  }
  func.func @transform_1(%arg0: i32, %arg1: i32) -> (i32, i32) {
    %c0_i32 = arith.constant 0 : i32
    %c0_i32_0 = arith.constant 0 : i32
    return %c0_i32, %arg1 : i32, i32
  }
  func.func @transform_2(%arg0: i32, %arg1: i32) -> (i32, i32) {
    %c0_i32 = arith.constant 0 : i32
    %c0_i32_0 = arith.constant 0 : i32
    return %c0_i32, %arg1 : i32, i32
  }
  func.func @transform_3(%arg0: i32, %arg1: i32) -> (i32, i32) {
    %c0_i32 = arith.constant 0 : i32
    %c0_i32_0 = arith.constant 0 : i32
    return %c0_i32, %arg1 : i32, i32
  }
  func.func @transform_4(%arg0: i32, %arg1: i32) -> (i32, i32) {
    %c0_i32 = arith.constant 0 : i32
    return %arg0, %arg1 : i32, i32
  }
}

module attributes {stable_mosaic.version = 11 : i64} {
  func.func @_tail_kernel(%arg0: i32, %arg1: memref<8x4x128xbf16, #tpu.memory_space<vmem>>, %arg2: memref<128x128xbf16, #tpu.memory_space<vmem>>, %arg3: memref<90x128xf32, #tpu.memory_space<vmem>>, %arg4: memref<1x128x128xbf16, #tpu.memory_space<vmem>>, %arg5: memref<1x1x128xf32, #tpu.memory_space<vmem>>, %arg6: memref<128x128xbf16, #tpu.memory_space<vmem>>, %arg7: memref<1x128xf32, #tpu.memory_space<vmem>>, %arg8: memref<128x128xbf16, #tpu.memory_space<vmem>>, %arg9: memref<1x128xf32, #tpu.memory_space<vmem>>, %arg10: memref<8x128xf32, #tpu.memory_space<vmem>>) attributes {dimension_semantics = [#tpu.dimension_semantics<arbitrary>], iteration_bounds = array<i64: 1>, scalar_prefetch = 0 : i64, scratch_operands = 0 : i64, tpu.core_type = #tpu.core_type<tc>, window_params = [{pipeline_mode = #tpu.pipeline_mode<synchronous>, transform_indices = @transform_0, window_bounds = array<i64: 8, 4, 128>}, {pipeline_mode = #tpu.pipeline_mode<synchronous>, transform_indices = @transform_1, window_bounds = array<i64: 128, 128>}, {pipeline_mode = #tpu.pipeline_mode<synchronous>, transform_indices = @transform_2, window_bounds = array<i64: 90, 128>}, {pipeline_mode = #tpu.pipeline_mode<synchronous>, transform_indices = @transform_3, window_bounds = array<i64: 1, 128, 128>}, {pipeline_mode = #tpu.pipeline_mode<synchronous>, transform_indices = @transform_4, window_bounds = array<i64: 1, 1, 128>}, {pipeline_mode = #tpu.pipeline_mode<synchronous>, transform_indices = @transform_5, window_bounds = array<i64: 128, 128>}, {pipeline_mode = #tpu.pipeline_mode<synchronous>, transform_indices = @transform_6, window_bounds = array<i64: 1, 128>}, {pipeline_mode = #tpu.pipeline_mode<synchronous>, transform_indices = @transform_7, window_bounds = array<i64: 128, 128>}, {pipeline_mode = #tpu.pipeline_mode<synchronous>, transform_indices = @transform_8, window_bounds = array<i64: 1, 128>}, {pipeline_mode = #tpu.pipeline_mode<synchronous>, transform_indices = @transform_9, window_bounds = array<i64: 8, 128>}]} {
    %c0 = arith.constant 0 : index
    %c0_0 = arith.constant 0 : index
    %c0_1 = arith.constant 0 : index
    %0 = vector.load %arg1[%c0, %c0_0, %c0_1] : memref<8x4x128xbf16, #tpu.memory_space<vmem>>, vector<8x4x128xbf16>
    %1 = arith.extf %0 : vector<8x4x128xbf16> to vector<8x4x128xf32>
    %cst = arith.constant dense<0.000000e+00> : vector<8x128xf32>
    %2 = vector.multi_reduction <add>, %1, %cst [1] : vector<8x4x128xf32> to vector<8x128xf32>
    %cst_2 = arith.constant 4.000000e+00 : f32
    %3 = vector.broadcast %cst_2 : f32 to vector<8x128xf32>
    %4 = arith.divf %2, %3 : vector<8x128xf32>
    %c0_i32 = arith.constant 0 : i32
    %c30_i32 = arith.constant 30 : i32
    %5 = arith.addi %c0_i32, %c30_i32 : i32
    %c1_i32 = arith.constant 1 : i32
    %6 = scf.for %arg11 = %c0_i32 to %5 step %c1_i32 iter_args(%arg12 = %4) -> (vector<8x128xf32>)  : i32 {
      %c3_i32 = arith.constant 3 : i32
      %14 = arith.muli %arg11, %c3_i32 : i32
      %c0_i32_11 = arith.constant 0 : i32
      %15 = arith.addi %14, %c0_i32_11 : i32
      %16 = arith.truncf %arg12 : vector<8x128xf32> to vector<8x128xbf16>
      %c0_12 = arith.constant 0 : index
      %c0_13 = arith.constant 0 : index
      %17 = vector.load %arg2[%c0_12, %c0_13] : memref<128x128xbf16, #tpu.memory_space<vmem>>, vector<128x128xbf16>
      %cst_14 = arith.constant dense<0.000000e+00> : vector<8x128xf32>
      %18 = tpu.matmul %16, %17, %cst_14 {dimension_numbers = #tpu.dot_dimension_numbers<[1], [0], [0], [1], [0, 0, 1, 1], [], []>} : vector<8x128xbf16>, vector<128x128xbf16>, vector<8x128xf32> -> vector<8x128xf32>
      %19 = arith.index_cast %15 : i32 to index
      %c0_15 = arith.constant 0 : index
      %20 = vector.load %arg3[%19, %c0_15] : memref<90x128xf32, #tpu.memory_space<vmem>>, vector<1x128xf32>
      %21 = vector.broadcast %20 : vector<1x128xf32> to vector<8x128xf32>
      %22 = arith.addf %18, %21 : vector<8x128xf32>
      %cst_16 = arith.constant 0.000000e+00 : f32
      %23 = vector.broadcast %cst_16 : f32 to vector<8x128xf32>
      %24 = arith.maximumf %22, %23 : vector<8x128xf32>
      %25 = arith.truncf %24 : vector<8x128xf32> to vector<8x128xbf16>
      %c0_17 = arith.constant 0 : index
      %c0_18 = arith.constant 0 : index
      %c0_19 = arith.constant 0 : index
      %26 = vector.load %arg4[%c0_17, %c0_18, %c0_19] : memref<1x128x128xbf16, #tpu.memory_space<vmem>>, vector<1x128x128xbf16>
      %27 = vector.shape_cast %26 : vector<1x128x128xbf16> to vector<128x128xbf16>
      %cst_20 = arith.constant dense<0.000000e+00> : vector<8x128xf32>
      %28 = tpu.matmul %25, %27, %cst_20 {dimension_numbers = #tpu.dot_dimension_numbers<[1], [0], [0], [1], [0, 0, 1, 1], [], []>} : vector<8x128xbf16>, vector<128x128xbf16>, vector<8x128xf32> -> vector<8x128xf32>
      %c0_21 = arith.constant 0 : index
      %c0_22 = arith.constant 0 : index
      %c0_23 = arith.constant 0 : index
      %29 = vector.load %arg5[%c0_21, %c0_22, %c0_23] : memref<1x1x128xf32, #tpu.memory_space<vmem>>, vector<1x1x128xf32>
      %30 = vector.shape_cast %29 : vector<1x1x128xf32> to vector<1x128xf32>
      %31 = vector.broadcast %30 : vector<1x128xf32> to vector<8x128xf32>
      %32 = arith.addf %28, %31 : vector<8x128xf32>
      %cst_24 = arith.constant 0.000000e+00 : f32
      %33 = vector.broadcast %cst_24 : f32 to vector<8x128xf32>
      %34 = arith.maximumf %32, %33 : vector<8x128xf32>
      %35 = arith.truncf %34 : vector<8x128xf32> to vector<8x128xbf16>
      %c0_25 = arith.constant 0 : index
      %c0_26 = arith.constant 0 : index
      %36 = vector.load %arg6[%c0_25, %c0_26] : memref<128x128xbf16, #tpu.memory_space<vmem>>, vector<128x128xbf16>
      %cst_27 = arith.constant dense<0.000000e+00> : vector<8x128xf32>
      %37 = tpu.matmul %35, %36, %cst_27 {dimension_numbers = #tpu.dot_dimension_numbers<[1], [0], [0], [1], [0, 0, 1, 1], [], []>} : vector<8x128xbf16>, vector<128x128xbf16>, vector<8x128xf32> -> vector<8x128xf32>
      %c0_28 = arith.constant 0 : index
      %c0_29 = arith.constant 0 : index
      %38 = vector.load %arg7[%c0_28, %c0_29] : memref<1x128xf32, #tpu.memory_space<vmem>>, vector<1x128xf32>
      %39 = vector.broadcast %38 : vector<1x128xf32> to vector<8x128xf32>
      %40 = arith.addf %37, %39 : vector<8x128xf32>
      %41 = math.tanh %40 : vector<8x128xf32>
      %cst_30 = arith.constant 1.000000e-01 : f32
      %42 = vector.broadcast %cst_30 : f32 to vector<8x128xf32>
      %43 = arith.mulf %42, %41 : vector<8x128xf32>
      %44 = arith.addf %arg12, %43 : vector<8x128xf32>
      %c1_i32_31 = arith.constant 1 : i32
      %45 = arith.addi %14, %c1_i32_31 : i32
      %46 = arith.truncf %44 : vector<8x128xf32> to vector<8x128xbf16>
      %c0_32 = arith.constant 0 : index
      %c0_33 = arith.constant 0 : index
      %47 = vector.load %arg2[%c0_32, %c0_33] : memref<128x128xbf16, #tpu.memory_space<vmem>>, vector<128x128xbf16>
      %cst_34 = arith.constant dense<0.000000e+00> : vector<8x128xf32>
      %48 = tpu.matmul %46, %47, %cst_34 {dimension_numbers = #tpu.dot_dimension_numbers<[1], [0], [0], [1], [0, 0, 1, 1], [], []>} : vector<8x128xbf16>, vector<128x128xbf16>, vector<8x128xf32> -> vector<8x128xf32>
      %49 = arith.index_cast %45 : i32 to index
      %c0_35 = arith.constant 0 : index
      %50 = vector.load %arg3[%49, %c0_35] : memref<90x128xf32, #tpu.memory_space<vmem>>, vector<1x128xf32>
      %51 = vector.broadcast %50 : vector<1x128xf32> to vector<8x128xf32>
      %52 = arith.addf %48, %51 : vector<8x128xf32>
      %cst_36 = arith.constant 0.000000e+00 : f32
      %53 = vector.broadcast %cst_36 : f32 to vector<8x128xf32>
      %54 = arith.maximumf %52, %53 : vector<8x128xf32>
      %55 = arith.truncf %54 : vector<8x128xf32> to vector<8x128xbf16>
      %c0_37 = arith.constant 0 : index
      %c0_38 = arith.constant 0 : index
      %c0_39 = arith.constant 0 : index
      %56 = vector.load %arg4[%c0_37, %c0_38, %c0_39] : memref<1x128x128xbf16, #tpu.memory_space<vmem>>, vector<1x128x128xbf16>
      %57 = vector.shape_cast %56 : vector<1x128x128xbf16> to vector<128x128xbf16>
      %cst_40 = arith.constant dense<0.000000e+00> : vector<8x128xf32>
      %58 = tpu.matmul %55, %57, %cst_40 {dimension_numbers = #tpu.dot_dimension_numbers<[1], [0], [0], [1], [0, 0, 1, 1], [], []>} : vector<8x128xbf16>, vector<128x128xbf16>, vector<8x128xf32> -> vector<8x128xf32>
      %c0_41 = arith.constant 0 : index
      %c0_42 = arith.constant 0 : index
      %c0_43 = arith.constant 0 : index
      %59 = vector.load %arg5[%c0_41, %c0_42, %c0_43] : memref<1x1x128xf32, #tpu.memory_space<vmem>>, vector<1x1x128xf32>
      %60 = vector.shape_cast %59 : vector<1x1x128xf32> to vector<1x128xf32>
      %61 = vector.broadcast %60 : vector<1x128xf32> to vector<8x128xf32>
      %62 = arith.addf %58, %61 : vector<8x128xf32>
      %cst_44 = arith.constant 0.000000e+00 : f32
      %63 = vector.broadcast %cst_44 : f32 to vector<8x128xf32>
      %64 = arith.maximumf %62, %63 : vector<8x128xf32>
      %65 = arith.truncf %64 : vector<8x128xf32> to vector<8x128xbf16>
      %c0_45 = arith.constant 0 : index
      %c0_46 = arith.constant 0 : index
      %66 = vector.load %arg6[%c0_45, %c0_46] : memref<128x128xbf16, #tpu.memory_space<vmem>>, vector<128x128xbf16>
      %cst_47 = arith.constant dense<0.000000e+00> : vector<8x128xf32>
      %67 = tpu.matmul %65, %66, %cst_47 {dimension_numbers = #tpu.dot_dimension_numbers<[1], [0], [0], [1], [0, 0, 1, 1], [], []>} : vector<8x128xbf16>, vector<128x128xbf16>, vector<8x128xf32> -> vector<8x128xf32>
      %c0_48 = arith.constant 0 : index
      %c0_49 = arith.constant 0 : index
      %68 = vector.load %arg7[%c0_48, %c0_49] : memref<1x128xf32, #tpu.memory_space<vmem>>, vector<1x128xf32>
      %69 = vector.broadcast %68 : vector<1x128xf32> to vector<8x128xf32>
      %70 = arith.addf %67, %69 : vector<8x128xf32>
      %71 = math.tanh %70 : vector<8x128xf32>
      %cst_50 = arith.constant 1.000000e-01 : f32
      %72 = vector.broadcast %cst_50 : f32 to vector<8x128xf32>
      %73 = arith.mulf %72, %71 : vector<8x128xf32>
      %74 = arith.addf %44, %73 : vector<8x128xf32>
      %c2_i32 = arith.constant 2 : i32
      %75 = arith.addi %14, %c2_i32 : i32
      %76 = arith.truncf %74 : vector<8x128xf32> to vector<8x128xbf16>
      %c0_51 = arith.constant 0 : index
      %c0_52 = arith.constant 0 : index
      %77 = vector.load %arg2[%c0_51, %c0_52] : memref<128x128xbf16, #tpu.memory_space<vmem>>, vector<128x128xbf16>
      %cst_53 = arith.constant dense<0.000000e+00> : vector<8x128xf32>
      %78 = tpu.matmul %76, %77, %cst_53 {dimension_numbers = #tpu.dot_dimension_numbers<[1], [0], [0], [1], [0, 0, 1, 1], [], []>} : vector<8x128xbf16>, vector<128x128xbf16>, vector<8x128xf32> -> vector<8x128xf32>
      %79 = arith.index_cast %75 : i32 to index
      %c0_54 = arith.constant 0 : index
      %80 = vector.load %arg3[%79, %c0_54] : memref<90x128xf32, #tpu.memory_space<vmem>>, vector<1x128xf32>
      %81 = vector.broadcast %80 : vector<1x128xf32> to vector<8x128xf32>
      %82 = arith.addf %78, %81 : vector<8x128xf32>
      %cst_55 = arith.constant 0.000000e+00 : f32
      %83 = vector.broadcast %cst_55 : f32 to vector<8x128xf32>
      %84 = arith.maximumf %82, %83 : vector<8x128xf32>
      %85 = arith.truncf %84 : vector<8x128xf32> to vector<8x128xbf16>
      %c0_56 = arith.constant 0 : index
      %c0_57 = arith.constant 0 : index
      %c0_58 = arith.constant 0 : index
      %86 = vector.load %arg4[%c0_56, %c0_57, %c0_58] : memref<1x128x128xbf16, #tpu.memory_space<vmem>>, vector<1x128x128xbf16>
      %87 = vector.shape_cast %86 : vector<1x128x128xbf16> to vector<128x128xbf16>
      %cst_59 = arith.constant dense<0.000000e+00> : vector<8x128xf32>
      %88 = tpu.matmul %85, %87, %cst_59 {dimension_numbers = #tpu.dot_dimension_numbers<[1], [0], [0], [1], [0, 0, 1, 1], [], []>} : vector<8x128xbf16>, vector<128x128xbf16>, vector<8x128xf32> -> vector<8x128xf32>
      %c0_60 = arith.constant 0 : index
      %c0_61 = arith.constant 0 : index
      %c0_62 = arith.constant 0 : index
      %89 = vector.load %arg5[%c0_60, %c0_61, %c0_62] : memref<1x1x128xf32, #tpu.memory_space<vmem>>, vector<1x1x128xf32>
      %90 = vector.shape_cast %89 : vector<1x1x128xf32> to vector<1x128xf32>
      %91 = vector.broadcast %90 : vector<1x128xf32> to vector<8x128xf32>
      %92 = arith.addf %88, %91 : vector<8x128xf32>
      %cst_63 = arith.constant 0.000000e+00 : f32
      %93 = vector.broadcast %cst_63 : f32 to vector<8x128xf32>
      %94 = arith.maximumf %92, %93 : vector<8x128xf32>
      %95 = arith.truncf %94 : vector<8x128xf32> to vector<8x128xbf16>
      %c0_64 = arith.constant 0 : index
      %c0_65 = arith.constant 0 : index
      %96 = vector.load %arg6[%c0_64, %c0_65] : memref<128x128xbf16, #tpu.memory_space<vmem>>, vector<128x128xbf16>
      %cst_66 = arith.constant dense<0.000000e+00> : vector<8x128xf32>
      %97 = tpu.matmul %95, %96, %cst_66 {dimension_numbers = #tpu.dot_dimension_numbers<[1], [0], [0], [1], [0, 0, 1, 1], [], []>} : vector<8x128xbf16>, vector<128x128xbf16>, vector<8x128xf32> -> vector<8x128xf32>
      %c0_67 = arith.constant 0 : index
      %c0_68 = arith.constant 0 : index
      %98 = vector.load %arg7[%c0_67, %c0_68] : memref<1x128xf32, #tpu.memory_space<vmem>>, vector<1x128xf32>
      %99 = vector.broadcast %98 : vector<1x128xf32> to vector<8x128xf32>
      %100 = arith.addf %97, %99 : vector<8x128xf32>
      %101 = math.tanh %100 : vector<8x128xf32>
      %cst_69 = arith.constant 1.000000e-01 : f32
      %102 = vector.broadcast %cst_69 : f32 to vector<8x128xf32>
      %103 = arith.mulf %102, %101 : vector<8x128xf32>
      %104 = arith.addf %74, %103 : vector<8x128xf32>
      scf.yield %104 : vector<8x128xf32>
    }
    %c30_i32_3 = arith.constant 30 : i32
    %7 = arith.truncf %6 : vector<8x128xf32> to vector<8x128xbf16>
    %c0_4 = arith.constant 0 : index
    %c0_5 = arith.constant 0 : index
    %8 = vector.load %arg8[%c0_4, %c0_5] : memref<128x128xbf16, #tpu.memory_space<vmem>>, vector<128x128xbf16>
    %cst_6 = arith.constant dense<0.000000e+00> : vector<8x128xf32>
    %9 = tpu.matmul %7, %8, %cst_6 {dimension_numbers = #tpu.dot_dimension_numbers<[1], [0], [0], [1], [0, 0, 1, 1], [], []>} : vector<8x128xbf16>, vector<128x128xbf16>, vector<8x128xf32> -> vector<8x128xf32>
    %c0_7 = arith.constant 0 : index
    %c0_8 = arith.constant 0 : index
    %10 = vector.load %arg9[%c0_7, %c0_8] : memref<1x128xf32, #tpu.memory_space<vmem>>, vector<1x128xf32>
    %11 = vector.broadcast %10 : vector<1x128xf32> to vector<8x128xf32>
    %12 = arith.addf %9, %11 : vector<8x128xf32>
    %c0_9 = arith.constant 0 : index
    %c0_10 = arith.constant 0 : index
    %13 = vector.load %arg10[%c0_9, %c0_10] : memref<8x128xf32, #tpu.memory_space<vmem>>, vector<8x128xf32>
    tpu.vector_store %arg10[%c0_9, %c0_10], %12 {strides = array<i32>} : memref<8x128xf32, #tpu.memory_space<vmem>>, vector<8x128xf32>,
    return
  }
  func.func @transform_0(%arg0: i32) -> (i32, i32, i32) {
    %c0_i32 = arith.constant 0 : i32
    %c0_i32_0 = arith.constant 0 : i32
    %c0_i32_1 = arith.constant 0 : i32
    %c0_i32_2 = arith.constant 0 : i32
    return %c0_i32, %c0_i32_0, %c0_i32_1 : i32, i32, i32
  }
  func.func @transform_1(%arg0: i32) -> (i32, i32) {
    %c0_i32 = arith.constant 0 : i32
    %c0_i32_0 = arith.constant 0 : i32
    %c0_i32_1 = arith.constant 0 : i32
    return %c0_i32, %c0_i32_0 : i32, i32
  }
  func.func @transform_2(%arg0: i32) -> (i32, i32) {
    %c0_i32 = arith.constant 0 : i32
    %c0_i32_0 = arith.constant 0 : i32
    %c0_i32_1 = arith.constant 0 : i32
    return %c0_i32, %c0_i32_0 : i32, i32
  }
  func.func @transform_3(%arg0: i32) -> (i32, i32, i32) {
    %c0_i32 = arith.constant 0 : i32
    %c0_i32_0 = arith.constant 0 : i32
    %c0_i32_1 = arith.constant 0 : i32
    %c0_i32_2 = arith.constant 0 : i32
    return %c0_i32, %c0_i32_0, %c0_i32_1 : i32, i32, i32
  }
  func.func @transform_4(%arg0: i32) -> (i32, i32, i32) {
    %c0_i32 = arith.constant 0 : i32
    %c0_i32_0 = arith.constant 0 : i32
    %c0_i32_1 = arith.constant 0 : i32
    %c0_i32_2 = arith.constant 0 : i32
    return %c0_i32, %c0_i32_0, %c0_i32_1 : i32, i32, i32
  }
  func.func @transform_5(%arg0: i32) -> (i32, i32) {
    %c0_i32 = arith.constant 0 : i32
    %c0_i32_0 = arith.constant 0 : i32
    %c0_i32_1 = arith.constant 0 : i32
    return %c0_i32, %c0_i32_0 : i32, i32
  }
  func.func @transform_6(%arg0: i32) -> (i32, i32) {
    %c0_i32 = arith.constant 0 : i32
    %c0_i32_0 = arith.constant 0 : i32
    %c0_i32_1 = arith.constant 0 : i32
    return %c0_i32, %c0_i32_0 : i32, i32
  }
  func.func @transform_7(%arg0: i32) -> (i32, i32) {
    %c0_i32 = arith.constant 0 : i32
    %c0_i32_0 = arith.constant 0 : i32
    %c0_i32_1 = arith.constant 0 : i32
    return %c0_i32, %c0_i32_0 : i32, i32
  }
  func.func @transform_8(%arg0: i32) -> (i32, i32) {
    %c0_i32 = arith.constant 0 : i32
    %c0_i32_0 = arith.constant 0 : i32
    %c0_i32_1 = arith.constant 0 : i32
    return %c0_i32, %c0_i32_0 : i32, i32
  }
  func.func @transform_9(%arg0: i32) -> (i32, i32) {
    %c0_i32 = arith.constant 0 : i32
    %c0_i32_0 = arith.constant 0 : i32
    %c0_i32_1 = arith.constant 0 : i32
    return %c0_i32, %c0_i32_0 : i32, i32
  }
}

</mosaic_0001>

<llo_original>
// kernel: sde_net_forward.3
$region0: #{sde_net_forward.3}
  #allocation0 [shape = 'u32[]', space=smem, size = 0x4, offset = 0x4, fixed_abs, tag = 'smem constant byte address 0x4 - core index']
  #allocation1 [shape = 'u32[144,128]{1,0:T(1,128)}', space=vmem, size = 0x12000, scoped, tag = 'internal scratch']
  %s0 = inlined_call_operand.vmem [shape: bf16[128,256], index: 0, kind: input, shape index: {}]
  %s1 = inlined_call_operand.vmem [shape: bf16[256,64], index: 1, kind: input, shape index: {}]
  %s2 = inlined_call_operand.vmem [shape: f32[1,64], index: 2, kind: input, shape index: {}]
  %s3 = inlined_call_operand.vmem [shape: f32[1,64], index: 3, kind: input, shape index: {}]
  %s4 = inlined_call_operand.vmem [shape: bf16[128,64], index: 4, kind: output, shape index: {}]
  %s5 = sld [smem:[#allocation0]]
  $region26: #{sde_net_forward.3} parent=0
    _
  %s7 = ssub.s32 1, %s5
  %s8 = scalar_select 0, %s7, %s5
  // Predicated region
  $region2: #{sde_net_forward.3} parent=0 // pred_check
    _
  $region3: #{sde_net_forward.3} parent=0 // pred_check_branch
    %10 = sbr.rel (0) target = $region5
  $region4: #{sde_net_forward.3} parent=0 // pred_region
    _
  $region5: #{sde_net_forward.3} parent=0 // pred_fallthru
    _
  // Predicated region
  $region6: #{sde_net_forward.3} parent=0 // pred_check
    _
  $region7: #{sde_net_forward.3} parent=0 // pred_check_branch
    %12 = sbr.rel (0) target = $region9
  $region8: #{sde_net_forward.3} parent=0 // pred_region
    _
  $region9: #{sde_net_forward.3} parent=0 // pred_fallthru
    _
  // Predicated region
  $region10: #{sde_net_forward.3} parent=0 // pred_check
    _
  $region11: #{sde_net_forward.3} parent=0 // pred_check_branch
    %14 = sbr.rel (0) target = $region13
  $region12: #{sde_net_forward.3} parent=0 // pred_region
    _
  $region13: #{sde_net_forward.3} parent=0 // pred_fallthru
    _
  // Predicated region
  $region14: #{sde_net_forward.3} parent=0 // pred_check
    _
  $region15: #{sde_net_forward.3} parent=0 // pred_check_branch
    %16 = sbr.rel (0) target = $region17
  $region16: #{sde_net_forward.3} parent=0 // pred_region
    _
  $region17: #{sde_net_forward.3} parent=0 // pred_fallthru
    _
  %v18 = vld [vmem:[%s0] sm:$0xff]
  %v19 = vld [vmem:[%s0 + $0x8] sm:$0xff]
  %v20 = vld [vmem:[%s0 + $0x10] sm:$0xff]
  %v21 = vld [vmem:[%s0 + $0x18] sm:$0xff]
  %v22 = vld [vmem:[%s0 + $0x20] sm:$0xff]
  %v23 = vld [vmem:[%s0 + $0x28] sm:$0xff]
  %v24 = vld [vmem:[%s0 + $0x30] sm:$0xff]
  %v25 = vld [vmem:[%s0 + $0x38] sm:$0xff]
  %v26 = vld [vmem:[%s0 + $0x40] sm:$0xff]
  %v27 = vld [vmem:[%s0 + $0x48] sm:$0xff]
  %v28 = vld [vmem:[%s0 + $0x50] sm:$0xff]
  %v29 = vld [vmem:[%s0 + $0x58] sm:$0xff]
  %v30 = vld [vmem:[%s0 + $0x60] sm:$0xff]
  %v31 = vld [vmem:[%s0 + $0x68] sm:$0xff]
  %v32 = vld [vmem:[%s0 + $0x70] sm:$0xff]
  %v33 = vld [vmem:[%s0 + $0x78] sm:$0xff]
  %v34 = vld [vmem:[%s1] sm:$0xf]
  %v35 = vld [vmem:[%s1 + $0x4] sm:$0xf]
  %v36 = vld [vmem:[%s1 + $0x8] sm:$0xf]
  %v37 = vld [vmem:[%s1 + $0xc] sm:$0xf]
  %v38 = vld [vmem:[%s1 + $0x10] sm:$0xf]
  %v39 = vld [vmem:[%s1 + $0x14] sm:$0xf]
  %v40 = vld [vmem:[%s1 + $0x18] sm:$0xf]
  %v41 = vld [vmem:[%s1 + $0x1c] sm:$0xf]
  %v42 = vld [vmem:[%s1 + $0x20] sm:$0xf]
  %v43 = vld [vmem:[%s1 + $0x24] sm:$0xf]
  %v44 = vld [vmem:[%s1 + $0x28] sm:$0xf]
  %v45 = vld [vmem:[%s1 + $0x2c] sm:$0xf]
  %v46 = vld [vmem:[%s1 + $0x30] sm:$0xf]
  %v47 = vld [vmem:[%s1 + $0x34] sm:$0xf]
  %v48 = vld [vmem:[%s1 + $0x38] sm:$0xf]
  %v49 = vld [vmem:[%s1 + $0x3c] sm:$0xf]
  %v50 = vld [vmem:[%s1 + $0x40] sm:$0xf]
  %v51 = vld [vmem:[%s1 + $0x44] sm:$0xf]
  %v52 = vld [vmem:[%s1 + $0x48] sm:$0xf]
  %v53 = vld [vmem:[%s1 + $0x4c] sm:$0xf]
  %v54 = vld [vmem:[%s1 + $0x50] sm:$0xf]
  %v55 = vld [vmem:[%s1 + $0x54] sm:$0xf]
  %v56 = vld [vmem:[%s1 + $0x58] sm:$0xf]
  %v57 = vld [vmem:[%s1 + $0x5c] sm:$0xf]
  %v58 = vld [vmem:[%s1 + $0x60] sm:$0xf]
  %v59 = vld [vmem:[%s1 + $0x64] sm:$0xf]
  %v60 = vld [vmem:[%s1 + $0x68] sm:$0xf]
  %v61 = vld [vmem:[%s1 + $0x6c] sm:$0xf]
  %v62 = vld [vmem:[%s1 + $0x70] sm:$0xf]
  %v63 = vld [vmem:[%s1 + $0x74] sm:$0xf]
  %v64 = vld [vmem:[%s1 + $0x78] sm:$0xf]
  %v65 = vld [vmem:[%s1 + $0x7c] sm:$0xf]
  %v82 = vunpack.c.l.b16 %v18
  %v83 = vunpack.c.h.b16 %v18
  %v84 = vunpack.c.l.b16 %v19
  %v85 = vunpack.c.h.b16 %v19
  %v86 = vunpack.c.l.b16 %v20
  %v87 = vunpack.c.h.b16 %v20
  %v88 = vunpack.c.l.b16 %v21
  %v89 = vunpack.c.h.b16 %v21
  %v90 = vunpack.c.l.b16 %v22
  %v91 = vunpack.c.h.b16 %v22
  %v92 = vunpack.c.l.b16 %v23
  %v93 = vunpack.c.h.b16 %v23
  %v94 = vunpack.c.l.b16 %v24
  %v95 = vunpack.c.h.b16 %v24
  %v96 = vunpack.c.l.b16 %v25
  %v97 = vunpack.c.h.b16 %v25
  %v98 = vunpack.c.l.b16 %v26
  %v99 = vunpack.c.h.b16 %v26
  %v100 = vunpack.c.l.b16 %v27
  %v101 = vunpack.c.h.b16 %v27
  %v102 = vunpack.c.l.b16 %v28
  %v103 = vunpack.c.h.b16 %v28
  %v104 = vunpack.c.l.b16 %v29
  %v105 = vunpack.c.h.b16 %v29
  %v106 = vunpack.c.l.b16 %v30
  %v107 = vunpack.c.h.b16 %v30
  %v108 = vunpack.c.l.b16 %v31
  %v109 = vunpack.c.h.b16 %v31
  %v110 = vunpack.c.l.b16 %v32
  %v111 = vunpack.c.h.b16 %v32
  %v112 = vunpack.c.l.b16 %v33
  %v113 = vunpack.c.h.b16 %v33
  %v114 = vpack.c.b16 %v84, %v82
  %v115 = vpack.c.b16 %v85, %v83
  %v116 = vpack.c.b16 %v88, %v86
  %v117 = vpack.c.b16 %v89, %v87
  %v118 = vpack.c.b16 %v92, %v90
  %v119 = vpack.c.b16 %v93, %v91
  %v120 = vpack.c.b16 %v96, %v94
  %v121 = vpack.c.b16 %v97, %v95
  %v122 = vpack.c.b16 %v100, %v98
  %v123 = vpack.c.b16 %v101, %v99
  %v124 = vpack.c.b16 %v104, %v102
  %v125 = vpack.c.b16 %v105, %v103
  %v126 = vpack.c.b16 %v108, %v106
  %v127 = vpack.c.b16 %v109, %v107
  %v128 = vpack.c.b16 %v112, %v110
  %v129 = vpack.c.b16 %v113, %v111
  %v178 = vunpack.c.l.b16 %v34
  %v179 = vunpack.c.l.b16 %v35
  %v180 = vunpack.c.l.b16 %v36
  %v181 = vunpack.c.l.b16 %v37
  %v182 = vunpack.c.l.b16 %v38
  %v183 = vunpack.c.l.b16 %v39
  %v184 = vunpack.c.l.b16 %v40
  %v185 = vunpack.c.l.b16 %v41
  %v186 = vunpack.c.l.b16 %v42
  %v187 = vunpack.c.l.b16 %v43
  %v188 = vunpack.c.l.b16 %v44
  %v189 = vunpack.c.l.b16 %v45
  %v190 = vunpack.c.l.b16 %v46
  %v191 = vunpack.c.l.b16 %v47
  %v192 = vunpack.c.l.b16 %v48
  %v193 = vunpack.c.l.b16 %v49
  %v194 = vunpack.c.l.b16 %v50
  %v195 = vunpack.c.l.b16 %v51
  %v196 = vunpack.c.l.b16 %v52
  %v197 = vunpack.c.l.b16 %v53
  %v198 = vunpack.c.l.b16 %v54
  %v199 = vunpack.c.l.b16 %v55
  %v200 = vunpack.c.l.b16 %v56
  %v201 = vunpack.c.l.b16 %v57
  %v202 = vunpack.c.l.b16 %v58
  %v203 = vunpack.c.l.b16 %v59
  %v204 = vunpack.c.l.b16 %v60
  %v205 = vunpack.c.l.b16 %v61
  %v206 = vunpack.c.l.b16 %v62
  %v207 = vunpack.c.l.b16 %v63
  %v208 = vunpack.c.l.b16 %v64
  %v209 = vunpack.c.l.b16 %v65
  %v210 = vpack.c.b16 %v179, %v178
  %v211 = vpack.c.b16 %v181, %v180
  %v212 = vpack.c.b16 %v183, %v182
  %v213 = vpack.c.b16 %v185, %v184
  %v214 = vpack.c.b16 %v187, %v186
  %v215 = vpack.c.b16 %v189, %v188
  %v216 = vpack.c.b16 %v191, %v190
  %v217 = vpack.c.b16 %v193, %v192
  %v218 = vpack.c.b16 %v195, %v194
  %v219 = vpack.c.b16 %v197, %v196
  %v220 = vpack.c.b16 %v199, %v198
  %v221 = vpack.c.b16 %v201, %v200
  %v222 = vpack.c.b16 %v203, %v202
  %v223 = vpack.c.b16 %v205, %v204
  %v224 = vpack.c.b16 %v207, %v206
  %v225 = vpack.c.b16 %v209, %v208
  %242 = vmatprep.subr.bf16.mxu0 0
  %243 = vmatpush1.bf16.msra.mxu0 %v210
  %244 = vmatprep.subr.bf16.mxu0 0
  %245 = vmatpush1.bf16.msra.mxu0 %v211
  %246 = vmatprep.subr.bf16.mxu0 0
  %247 = vmatpush1.bf16.msra.mxu0 %v212
  %248 = vmatprep.subr.bf16.mxu0 0
  %249 = vmatpush1.bf16.msra.mxu0 %v213
  %250 = vmatprep.subr.bf16.mxu0 0
  %251 = vmatpush1.bf16.msra.mxu0 %v214
  %252 = vmatprep.subr.bf16.mxu0 0
  %253 = vmatpush1.bf16.msra.mxu0 %v215
  %254 = vmatprep.subr.bf16.mxu0 0
  %255 = vmatpush1.bf16.msra.mxu0 %v216
  %256 = vmatprep.subr.bf16.mxu0 0
  %257 = vmatpush1.bf16.msra.mxu0 %v217
  %258 = vmatprep.subr.bf16.mxu0 0
  %259 = vmatpush1.bf16.msra.mxu0 %v218
  %260 = vmatprep.subr.bf16.mxu0 0
  %261 = vmatpush1.bf16.msra.mxu0 %v219
  %262 = vmatprep.subr.bf16.mxu0 0
  %263 = vmatpush1.bf16.msra.mxu0 %v220
  %264 = vmatprep.subr.bf16.mxu0 0
  %265 = vmatpush1.bf16.msra.mxu0 %v221
  %266 = vmatprep.subr.bf16.mxu0 0
  %267 = vmatpush1.bf16.msra.mxu0 %v222
  %268 = vmatprep.subr.bf16.mxu0 0
  %269 = vmatpush1.bf16.msra.mxu0 %v223
  %270 = vmatprep.subr.bf16.mxu0 0
  %271 = vmatpush1.bf16.msra.mxu0 %v224
  %272 = vmatprep.subr.bf16.mxu0 0
  %273 = vmatpush1.bf16.msra.mxu0 %v225
  %274 = vmatprep.mubr.bf16.mxu0 %v115
  %275 = vmatmul.mubr.bf16.gmra.mrb[0].mxu0 %v114
  %v276 = vpop.f32.mrb[0].mxu0
  %v277 = vadd.f32 0.0, %v276
  %v278 = vpop.f32.mrb[0].mxu0
  %v279 = vpop.f32.mrb[0].mxu0
  %v280 = vadd.f32 0.0, %v279
  %v281 = vpop.f32.mrb[0].mxu0
  %282 = vmatprep.mubr.bf16.mxu0 %v117
  %283 = vmatmul.mubr.bf16.gmra.mrb[0].mxu0 %v116
  %v284 = vpop.f32.mrb[0].mxu0
  %v285 = vadd.f32 0.0, %v284
  %v286 = vpop.f32.mrb[0].mxu0
  %v287 = vpop.f32.mrb[0].mxu0
  %v288 = vadd.f32 0.0, %v287
  %v289 = vpop.f32.mrb[0].mxu0
  %290 = vmatprep.mubr.bf16.mxu0 %v119
  %291 = vmatmul.mubr.bf16.gmra.mrb[0].mxu0 %v118
  %v292 = vpop.f32.mrb[0].mxu0
  %v293 = vadd.f32 0.0, %v292
  %v294 = vpop.f32.mrb[0].mxu0
  %v295 = vpop.f32.mrb[0].mxu0
  %v296 = vadd.f32 0.0, %v295
  %v297 = vpop.f32.mrb[0].mxu0
  %298 = vmatprep.mubr.bf16.mxu0 %v121
  %299 = vmatmul.mubr.bf16.gmra.mrb[0].mxu0 %v120
  %v300 = vpop.f32.mrb[0].mxu0
  %v301 = vadd.f32 0.0, %v300
  %v302 = vpop.f32.mrb[0].mxu0
  %v303 = vpop.f32.mrb[0].mxu0
  %v304 = vadd.f32 0.0, %v303
  %v305 = vpop.f32.mrb[0].mxu0
  %306 = vmatprep.mubr.bf16.mxu0 %v123
  %307 = vmatmul.mubr.bf16.gmra.mrb[0].mxu0 %v122
  %v308 = vpop.f32.mrb[0].mxu0
  %v309 = vadd.f32 0.0, %v308
  %v310 = vpop.f32.mrb[0].mxu0
  %v311 = vpop.f32.mrb[0].mxu0
  %v312 = vadd.f32 0.0, %v311
  %v313 = vpop.f32.mrb[0].mxu0
  %314 = vmatprep.mubr.bf16.mxu0 %v125
  %315 = vmatmul.mubr.bf16.gmra.mrb[0].mxu0 %v124
  %v316 = vpop.f32.mrb[0].mxu0
  %v317 = vadd.f32 0.0, %v316
  %v318 = vpop.f32.mrb[0].mxu0
  %v319 = vpop.f32.mrb[0].mxu0
  %v320 = vadd.f32 0.0, %v319
  %v321 = vpop.f32.mrb[0].mxu0
  %322 = vmatprep.mubr.bf16.mxu0 %v127
  %323 = vmatmul.mubr.bf16.gmra.mrb[0].mxu0 %v126
  %v324 = vpop.f32.mrb[0].mxu0
  %v325 = vadd.f32 0.0, %v324
  %v326 = vpop.f32.mrb[0].mxu0
  %v327 = vpop.f32.mrb[0].mxu0
  %v328 = vadd.f32 0.0, %v327
  %v329 = vpop.f32.mrb[0].mxu0
  %330 = vmatprep.mubr.bf16.mxu0 %v129
  %331 = vmatmul.mubr.bf16.gmra.mrb[0].mxu0 %v128
  %v332 = vpop.f32.mrb[0].mxu0
  %v333 = vadd.f32 0.0, %v332
  %v334 = vpop.f32.mrb[0].mxu0
  %v335 = vpop.f32.mrb[0].mxu0
  %v336 = vadd.f32 0.0, %v335
  %v337 = vpop.f32.mrb[0].mxu0
  %338 = vdwg.mxu0
  %v339 = vld [vmem:[%s2] sm:$0x1]
  %v341 = vlaneseq
  %v342 = vshrl.u32 %v341, 7
  %v343 = vsub.s32 0, %v342
  %v344 = vrot.slane %v339, %v343
  %v346 = vmul.f32 %v277, %v344
  %v347 = vmul.f32 %v280, %v344
  %v348 = vmul.f32 %v285, %v344
  %v349 = vmul.f32 %v288, %v344
  %v350 = vmul.f32 %v293, %v344
  %v351 = vmul.f32 %v296, %v344
  %v352 = vmul.f32 %v301, %v344
  %v353 = vmul.f32 %v304, %v344
  %v354 = vmul.f32 %v309, %v344
  %v355 = vmul.f32 %v312, %v344
  %v356 = vmul.f32 %v317, %v344
  %v357 = vmul.f32 %v320, %v344
  %v358 = vmul.f32 %v325, %v344
  %v359 = vmul.f32 %v328, %v344
  %v360 = vmul.f32 %v333, %v344
  %v361 = vmul.f32 %v336, %v344
  %v362 = vld [vmem:[%s3] sm:$0x1]
  %v364 = vlaneseq
  %v365 = vshrl.u32 %v364, 7
  %v366 = vsub.s32 0, %v365
  %v367 = vrot.slane %v362, %v366
  %v369 = vadd.f32 %v346, %v367
  %v370 = vadd.f32 %v347, %v367
  %v371 = vadd.f32 %v348, %v367
  %v372 = vadd.f32 %v349, %v367
  %v373 = vadd.f32 %v350, %v367
  %v374 = vadd.f32 %v351, %v367
  %v375 = vadd.f32 %v352, %v367
  %v376 = vadd.f32 %v353, %v367
  %v377 = vadd.f32 %v354, %v367
  %v378 = vadd.f32 %v355, %v367
  %v379 = vadd.f32 %v356, %v367
  %v380 = vadd.f32 %v357, %v367
  %v381 = vadd.f32 %v358, %v367
  %v382 = vadd.f32 %v359, %v367
  %v383 = vadd.f32 %v360, %v367
  %v384 = vadd.f32 %v361, %v367
  %v385 = vmax.f32 %v369, 0.0
  %v386 = vmax.f32 %v370, 0.0
  %v387 = vmax.f32 %v371, 0.0
  %v388 = vmax.f32 %v372, 0.0
  %v389 = vmax.f32 %v373, 0.0
  %v390 = vmax.f32 %v374, 0.0
  %v391 = vmax.f32 %v375, 0.0
  %v392 = vmax.f32 %v376, 0.0
  %v393 = vmax.f32 %v377, 0.0
  %v394 = vmax.f32 %v378, 0.0
  %v395 = vmax.f32 %v379, 0.0
  %v396 = vmax.f32 %v380, 0.0
  %v397 = vmax.f32 %v381, 0.0
  %v398 = vmax.f32 %v382, 0.0
  %v399 = vmax.f32 %v383, 0.0
  %v400 = vmax.f32 %v384, 0.0
  %v401 = vpack.c.bf16 %v386, %v385
  %v402 = vpack.c.bf16 %v388, %v387
  %v403 = vpack.c.bf16 %v390, %v389
  %v404 = vpack.c.bf16 %v392, %v391
  %v405 = vpack.c.bf16 %v394, %v393
  %v406 = vpack.c.bf16 %v396, %v395
  %v407 = vpack.c.bf16 %v398, %v397
  %v408 = vpack.c.bf16 %v400, %v399
  %v417 = vunpack.c.l.b16 %v401
  %v418 = vunpack.c.h.b16 %v401
  %v419 = vunpack.c.l.b16 %v402
  %v420 = vunpack.c.h.b16 %v402
  %v421 = vunpack.c.l.b16 %v403
  %v422 = vunpack.c.h.b16 %v403
  %v423 = vunpack.c.l.b16 %v404
  %v424 = vunpack.c.h.b16 %v404
  %v425 = vunpack.c.l.b16 %v405
  %v426 = vunpack.c.h.b16 %v405
  %v427 = vunpack.c.l.b16 %v406
  %v428 = vunpack.c.h.b16 %v406
  %v429 = vunpack.c.l.b16 %v407
  %v430 = vunpack.c.h.b16 %v407
  %v431 = vunpack.c.l.b16 %v408
  %v432 = vunpack.c.h.b16 %v408
  %v433 = vpack.c.b16 %v417, %v417
  %v434 = vpack.c.b16 %v418, %v418
  %v435 = vpack.c.b16 %v419, %v419
  %v436 = vpack.c.b16 %v420, %v420
  %v437 = vpack.c.b16 %v421, %v421
  %v438 = vpack.c.b16 %v422, %v422
  %v439 = vpack.c.b16 %v423, %v423
  %v440 = vpack.c.b16 %v424, %v424
  %v441 = vpack.c.b16 %v425, %v425
  %v442 = vpack.c.b16 %v426, %v426
  %v443 = vpack.c.b16 %v427, %v427
  %v444 = vpack.c.b16 %v428, %v428
  %v445 = vpack.c.b16 %v429, %v429
  %v446 = vpack.c.b16 %v430, %v430
  %v447 = vpack.c.b16 %v431, %v431
  %v448 = vpack.c.b16 %v432, %v432
  %vm465 = vcmask 519168
  %466 = vst.msk [vmem:[%s4] sm:$0xf] %vm465, %v433
  %467 = vst.msk [vmem:[%s4 + $0x4] sm:$0xf] %vm465, %v434
  %468 = vst.msk [vmem:[%s4 + $0x8] sm:$0xf] %vm465, %v435
  %469 = vst.msk [vmem:[%s4 + $0xc] sm:$0xf] %vm465, %v436
  %470 = vst.msk [vmem:[%s4 + $0x10] sm:$0xf] %vm465, %v437
  %471 = vst.msk [vmem:[%s4 + $0x14] sm:$0xf] %vm465, %v438
  %472 = vst.msk [vmem:[%s4 + $0x18] sm:$0xf] %vm465, %v439
  %473 = vst.msk [vmem:[%s4 + $0x1c] sm:$0xf] %vm465, %v440
  %474 = vst.msk [vmem:[%s4 + $0x20] sm:$0xf] %vm465, %v441
  %475 = vst.msk [vmem:[%s4 + $0x24] sm:$0xf] %vm465, %v442
  %476 = vst.msk [vmem:[%s4 + $0x28] sm:$0xf] %vm465, %v443
  %477 = vst.msk [vmem:[%s4 + $0x2c] sm:$0xf] %vm465, %v444
  %478 = vst.msk [vmem:[%s4 + $0x30] sm:$0xf] %vm465, %v445
  %479 = vst.msk [vmem:[%s4 + $0x34] sm:$0xf] %vm465, %v446
  %480 = vst.msk [vmem:[%s4 + $0x38] sm:$0xf] %vm465, %v447
  %481 = vst.msk [vmem:[%s4 + $0x3c] sm:$0xf] %vm465, %v448
  // Predicated region
  $region18: #{sde_net_forward.3} parent=0 // pred_check
    _
  $region19: #{sde_net_forward.3} parent=0 // pred_check_branch
    %483 = sbr.rel (0) target = $region21
  $region20: #{sde_net_forward.3} parent=0 // pred_region
    _
  $region21: #{sde_net_forward.3} parent=0 // pred_fallthru
    _
  // Predicated region
  $region22: #{sde_net_forward.3} parent=0 // pred_check
    _
  $region23: #{sde_net_forward.3} parent=0 // pred_check_branch
    %485 = sbr.rel (0) target = $region25
  $region24: #{sde_net_forward.3} parent=0 // pred_region
    _
  $region25: #{sde_net_forward.3} parent=0 // pred_fallthru
    _

// kernel: sde_net_forward.4
$region0: #{sde_net_forward.4}
  #allocation0 [shape = 'u32[]', space=smem, size = 0x4, offset = 0x4, fixed_abs, tag = 'smem constant byte address 0x4 - core index']
  #allocation1 [shape = 'u32[144,128]{1,0:T(1,128)}', space=vmem, size = 0x12000, scoped, tag = 'internal scratch']
  %s0 = inlined_call_operand.vmem [shape: bf16[32,640], index: 0, kind: input, shape index: {}]
  %s1 = inlined_call_operand.vmem [shape: bf16[640,128], index: 1, kind: input, shape index: {}]
  %s2 = inlined_call_operand.vmem [shape: f32[1,128], index: 2, kind: input, shape index: {}]
  %s3 = inlined_call_operand.vmem [shape: f32[1,128], index: 3, kind: input, shape index: {}]
  %s4 = inlined_call_operand.vmem [shape: bf16[32,128], index: 4, kind: output, shape index: {}]
  %s5 = sld [smem:[#allocation0]]
  $region26: #{sde_net_forward.4} parent=0
    _
  %s7 = ssub.s32 1, %s5
  %s8 = scalar_select 0, %s7, %s5
  // Predicated region
  $region2: #{sde_net_forward.4} parent=0 // pred_check
    _
  $region3: #{sde_net_forward.4} parent=0 // pred_check_branch
    %10 = sbr.rel (0) target = $region5
  $region4: #{sde_net_forward.4} parent=0 // pred_region
    _
  $region5: #{sde_net_forward.4} parent=0 // pred_fallthru
    _
  // Predicated region
  $region6: #{sde_net_forward.4} parent=0 // pred_check
    _
  $region7: #{sde_net_forward.4} parent=0 // pred_check_branch
    %12 = sbr.rel (0) target = $region9
  $region8: #{sde_net_forward.4} parent=0 // pred_region
    _
  $region9: #{sde_net_forward.4} parent=0 // pred_fallthru
    _
  // Predicated region
  $region10: #{sde_net_forward.4} parent=0 // pred_check
    _
  $region11: #{sde_net_forward.4} parent=0 // pred_check_branch
    %14 = sbr.rel (0) target = $region13
  $region12: #{sde_net_forward.4} parent=0 // pred_region
    _
  $region13: #{sde_net_forward.4} parent=0 // pred_fallthru
    _
  // Predicated region
  $region14: #{sde_net_forward.4} parent=0 // pred_check
    _
  $region15: #{sde_net_forward.4} parent=0 // pred_check_branch
    %16 = sbr.rel (0) target = $region17
  $region16: #{sde_net_forward.4} parent=0 // pred_region
    _
  $region17: #{sde_net_forward.4} parent=0 // pred_fallthru
    _
  %v18 = vld [vmem:[%s0] sm:$0xff]
  %v19 = vld [vmem:[%s0 + $0x8] sm:$0xff]
  %v20 = vld [vmem:[%s0 + $0x10] sm:$0xf]
  %v21 = vld [vmem:[%s0 + $0x14] sm:$0xff]
  %v22 = vld [vmem:[%s0 + $0x1c] sm:$0xff]
  %v23 = vld [vmem:[%s0 + $0x24] sm:$0xf]
  %v24 = vld [vmem:[%s0 + $0x28] sm:$0xff]
  %v25 = vld [vmem:[%s0 + $0x30] sm:$0xff]
  %v26 = vld [vmem:[%s0 + $0x38] sm:$0xf]
  %v27 = vld [vmem:[%s0 + $0x3c] sm:$0xff]
  %v28 = vld [vmem:[%s0 + $0x44] sm:$0xff]
  %v29 = vld [vmem:[%s0 + $0x4c] sm:$0xf]
  %v30 = vld [vmem:[%s1] sm:$0xf]
  %v31 = vld [vmem:[%s1 + $0x4] sm:$0xf]
  %v32 = vld [vmem:[%s1 + $0x8] sm:$0xf]
  %v33 = vld [vmem:[%s1 + $0xc] sm:$0xf]
  %v34 = vld [vmem:[%s1 + $0x10] sm:$0xf]
  %v35 = vld [vmem:[%s1 + $0x14] sm:$0xf]
  %v36 = vld [vmem:[%s1 + $0x18] sm:$0xf]
  %v37 = vld [vmem:[%s1 + $0x1c] sm:$0xf]
  %v38 = vld [vmem:[%s1 + $0x20] sm:$0xf]
  %v39 = vld [vmem:[%s1 + $0x24] sm:$0xf]
  %v40 = vld [vmem:[%s1 + $0x28] sm:$0xf]
  %v41 = vld [vmem:[%s1 + $0x2c] sm:$0xf]
  %v42 = vld [vmem:[%s1 + $0x30] sm:$0xf]
  %v43 = vld [vmem:[%s1 + $0x34] sm:$0xf]
  %v44 = vld [vmem:[%s1 + $0x38] sm:$0xf]
  %v45 = vld [vmem:[%s1 + $0x3c] sm:$0xf]
  %v46 = vld [vmem:[%s1 + $0x40] sm:$0xf]
  %v47 = vld [vmem:[%s1 + $0x44] sm:$0xf]
  %v48 = vld [vmem:[%s1 + $0x48] sm:$0xf]
  %v49 = vld [vmem:[%s1 + $0x4c] sm:$0xf]
  %v50 = vld [vmem:[%s1 + $0x50] sm:$0xf]
  %v51 = vld [vmem:[%s1 + $0x54] sm:$0xf]
  %v52 = vld [vmem:[%s1 + $0x58] sm:$0xf]
  %v53 = vld [vmem:[%s1 + $0x5c] sm:$0xf]
  %v54 = vld [vmem:[%s1 + $0x60] sm:$0xf]
  %v55 = vld [vmem:[%s1 + $0x64] sm:$0xf]
  %v56 = vld [vmem:[%s1 + $0x68] sm:$0xf]
  %v57 = vld [vmem:[%s1 + $0x6c] sm:$0xf]
  %v58 = vld [vmem:[%s1 + $0x70] sm:$0xf]
  %v59 = vld [vmem:[%s1 + $0x74] sm:$0xf]
  %v60 = vld [vmem:[%s1 + $0x78] sm:$0xf]
  %v61 = vld [vmem:[%s1 + $0x7c] sm:$0xf]
  %v62 = vld [vmem:[%s1 + $0x80] sm:$0xf]
  %v63 = vld [vmem:[%s1 + $0x84] sm:$0xf]
  %v64 = vld [vmem:[%s1 + $0x88] sm:$0xf]
  %v65 = vld [vmem:[%s1 + $0x8c] sm:$0xf]
  %v66 = vld [vmem:[%s1 + $0x90] sm:$0xf]
  %v67 = vld [vmem:[%s1 + $0x94] sm:$0xf]
  %v68 = vld [vmem:[%s1 + $0x98] sm:$0xf]
  %v69 = vld [vmem:[%s1 + $0x9c] sm:$0xf]
  %v70 = vld [vmem:[%s1 + $0xa0] sm:$0xf]
  %v71 = vld [vmem:[%s1 + $0xa4] sm:$0xf]
  %v72 = vld [vmem:[%s1 + $0xa8] sm:$0xf]
  %v73 = vld [vmem:[%s1 + $0xac] sm:$0xf]
  %v74 = vld [vmem:[%s1 + $0xb0] sm:$0xf]
  %v75 = vld [vmem:[%s1 + $0xb4] sm:$0xf]
  %v76 = vld [vmem:[%s1 + $0xb8] sm:$0xf]
  %v77 = vld [vmem:[%s1 + $0xbc] sm:$0xf]
  %v78 = vld [vmem:[%s1 + $0xc0] sm:$0xf]
  %v79 = vld [vmem:[%s1 + $0xc4] sm:$0xf]
  %v80 = vld [vmem:[%s1 + $0xc8] sm:$0xf]
  %v81 = vld [vmem:[%s1 + $0xcc] sm:$0xf]
  %v82 = vld [vmem:[%s1 + $0xd0] sm:$0xf]
  %v83 = vld [vmem:[%s1 + $0xd4] sm:$0xf]
  %v84 = vld [vmem:[%s1 + $0xd8] sm:$0xf]
  %v85 = vld [vmem:[%s1 + $0xdc] sm:$0xf]
  %v86 = vld [vmem:[%s1 + $0xe0] sm:$0xf]
  %v87 = vld [vmem:[%s1 + $0xe4] sm:$0xf]
  %v88 = vld [vmem:[%s1 + $0xe8] sm:$0xf]
  %v89 = vld [vmem:[%s1 + $0xec] sm:$0xf]
  %v90 = vld [vmem:[%s1 + $0xf0] sm:$0xf]
  %v91 = vld [vmem:[%s1 + $0xf4] sm:$0xf]
  %v92 = vld [vmem:[%s1 + $0xf8] sm:$0xf]
  %v93 = vld [vmem:[%s1 + $0xfc] sm:$0xf]
  %v94 = vld [vmem:[%s1 + $0x100] sm:$0xf]
  %v95 = vld [vmem:[%s1 + $0x104] sm:$0xf]
  %v96 = vld [vmem:[%s1 + $0x108] sm:$0xf]
  %v97 = vld [vmem:[%s1 + $0x10c] sm:$0xf]
  %v98 = vld [vmem:[%s1 + $0x110] sm:$0xf]
  %v99 = vld [vmem:[%s1 + $0x114] sm:$0xf]
  %v100 = vld [vmem:[%s1 + $0x118] sm:$0xf]
  %v101 = vld [vmem:[%s1 + $0x11c] sm:$0xf]
  %v102 = vld [vmem:[%s1 + $0x120] sm:$0xf]
  %v103 = vld [vmem:[%s1 + $0x124] sm:$0xf]
  %v104 = vld [vmem:[%s1 + $0x128] sm:$0xf]
  %v105 = vld [vmem:[%s1 + $0x12c] sm:$0xf]
  %v106 = vld [vmem:[%s1 + $0x130] sm:$0xf]
  %v107 = vld [vmem:[%s1 + $0x134] sm:$0xf]
  %v108 = vld [vmem:[%s1 + $0x138] sm:$0xf]
  %v109 = vld [vmem:[%s1 + $0x13c] sm:$0xf]
  %v122 = vunpack.c.l.b16 %v18
  %v123 = vunpack.c.h.b16 %v18
  %v124 = vunpack.c.l.b16 %v19
  %v125 = vunpack.c.h.b16 %v19
  %v126 = vunpack.c.l.b16 %v20
  %v127 = vunpack.c.l.b16 %v21
  %v128 = vunpack.c.h.b16 %v21
  %v129 = vunpack.c.l.b16 %v22
  %v130 = vunpack.c.h.b16 %v22
  %v131 = vunpack.c.l.b16 %v23
  %v132 = vunpack.c.l.b16 %v24
  %v133 = vunpack.c.h.b16 %v24
  %v134 = vunpack.c.l.b16 %v25
  %v135 = vunpack.c.h.b16 %v25
  %v136 = vunpack.c.l.b16 %v26
  %v137 = vunpack.c.l.b16 %v27
  %v138 = vunpack.c.h.b16 %v27
  %v139 = vunpack.c.l.b16 %v28
  %v140 = vunpack.c.h.b16 %v28
  %v141 = vunpack.c.l.b16 %v29
  %v142 = vpack.c.b16 %v127, %v122
  %v143 = vpack.c.b16 %v128, %v123
  %v144 = vpack.c.b16 %v129, %v124
  %v145 = vpack.c.b16 %v130, %v125
  %v146 = vpack.c.b16 %v131, %v126
  %v147 = vpack.c.b16 %v137, %v132
  %v148 = vpack.c.b16 %v138, %v133
  %v149 = vpack.c.b16 %v139, %v134
  %v150 = vpack.c.b16 %v140, %v135
  %v151 = vpack.c.b16 %v141, %v136
  %v242 = vunpack.c.l.b16 %v30
  %v243 = vunpack.c.l.b16 %v31
  %v244 = vunpack.c.l.b16 %v32
  %v245 = vunpack.c.l.b16 %v33
  %v246 = vunpack.c.l.b16 %v34
  %v247 = vunpack.c.l.b16 %v35
  %v248 = vunpack.c.l.b16 %v36
  %v249 = vunpack.c.l.b16 %v37
  %v250 = vunpack.c.l.b16 %v38
  %v251 = vunpack.c.l.b16 %v39
  %v252 = vunpack.c.l.b16 %v40
  %v253 = vunpack.c.l.b16 %v41
  %v254 = vunpack.c.l.b16 %v42
  %v255 = vunpack.c.l.b16 %v43
  %v256 = vunpack.c.l.b16 %v44
  %v257 = vunpack.c.l.b16 %v45
  %v258 = vunpack.c.l.b16 %v46
  %v259 = vunpack.c.l.b16 %v47
  %v260 = vunpack.c.l.b16 %v48
  %v261 = vunpack.c.l.b16 %v49
  %v262 = vunpack.c.l.b16 %v50
  %v263 = vunpack.c.l.b16 %v51
  %v264 = vunpack.c.l.b16 %v52
  %v265 = vunpack.c.l.b16 %v53
  %v266 = vunpack.c.l.b16 %v54
  %v267 = vunpack.c.l.b16 %v55
  %v268 = vunpack.c.l.b16 %v56
  %v269 = vunpack.c.l.b16 %v57
  %v270 = vunpack.c.l.b16 %v58
  %v271 = vunpack.c.l.b16 %v59
  %v272 = vunpack.c.l.b16 %v60
  %v273 = vunpack.c.l.b16 %v61
  %v274 = vunpack.c.l.b16 %v62
  %v275 = vunpack.c.l.b16 %v63
  %v276 = vunpack.c.l.b16 %v64
  %v277 = vunpack.c.l.b16 %v65
  %v278 = vunpack.c.l.b16 %v66
  %v279 = vunpack.c.l.b16 %v67
  %v280 = vunpack.c.l.b16 %v68
  %v281 = vunpack.c.l.b16 %v69
  %v282 = vunpack.c.l.b16 %v70
  %v283 = vunpack.c.l.b16 %v71
  %v284 = vunpack.c.l.b16 %v72
  %v285 = vunpack.c.l.b16 %v73
  %v286 = vunpack.c.l.b16 %v74
  %v287 = vunpack.c.l.b16 %v75
  %v288 = vunpack.c.l.b16 %v76
  %v289 = vunpack.c.l.b16 %v77
  %v290 = vunpack.c.l.b16 %v78
  %v291 = vunpack.c.l.b16 %v79
  %v292 = vunpack.c.l.b16 %v80
  %v293 = vunpack.c.l.b16 %v81
  %v294 = vunpack.c.l.b16 %v82
  %v295 = vunpack.c.l.b16 %v83
  %v296 = vunpack.c.l.b16 %v84
  %v297 = vunpack.c.l.b16 %v85
  %v298 = vunpack.c.l.b16 %v86
  %v299 = vunpack.c.l.b16 %v87
  %v300 = vunpack.c.l.b16 %v88
  %v301 = vunpack.c.l.b16 %v89
  %v302 = vunpack.c.l.b16 %v90
  %v303 = vunpack.c.l.b16 %v91
  %v304 = vunpack.c.l.b16 %v92
  %v305 = vunpack.c.l.b16 %v93
  %v306 = vunpack.c.l.b16 %v94
  %v307 = vunpack.c.l.b16 %v95
  %v308 = vunpack.c.l.b16 %v96
  %v309 = vunpack.c.l.b16 %v97
  %v310 = vunpack.c.l.b16 %v98
  %v311 = vunpack.c.l.b16 %v99
  %v312 = vunpack.c.l.b16 %v100
  %v313 = vunpack.c.l.b16 %v101
  %v314 = vunpack.c.l.b16 %v102
  %v315 = vunpack.c.l.b16 %v103
  %v316 = vunpack.c.l.b16 %v104
  %v317 = vunpack.c.l.b16 %v105
  %v318 = vunpack.c.l.b16 %v106
  %v319 = vunpack.c.l.b16 %v107
  %v320 = vunpack.c.l.b16 %v108
  %v321 = vunpack.c.l.b16 %v109
  %v322 = vpack.c.b16 %v243, %v242
  %v323 = vpack.c.b16 %v245, %v244
  %v324 = vpack.c.b16 %v247, %v246
  %v325 = vpack.c.b16 %v249, %v248
  %v326 = vpack.c.b16 %v251, %v250
  %v327 = vpack.c.b16 %v253, %v252
  %v328 = vpack.c.b16 %v255, %v254
  %v329 = vpack.c.b16 %v257, %v256
  %v330 = vpack.c.b16 %v259, %v258
  %v331 = vpack.c.b16 %v261, %v260
  %v332 = vpack.c.b16 %v263, %v262
  %v333 = vpack.c.b16 %v265, %v264
  %v334 = vpack.c.b16 %v267, %v266
  %v335 = vpack.c.b16 %v269, %v268
  %v336 = vpack.c.b16 %v271, %v270
  %v337 = vpack.c.b16 %v273, %v272
  %v338 = vpack.c.b16 %v275, %v274
  %v339 = vpack.c.b16 %v277, %v276
  %v340 = vpack.c.b16 %v279, %v278
  %v341 = vpack.c.b16 %v281, %v280
  %v342 = vpack.c.b16 %v283, %v282
  %v343 = vpack.c.b16 %v285, %v284
  %v344 = vpack.c.b16 %v287, %v286
  %v345 = vpack.c.b16 %v289, %v288
  %v346 = vpack.c.b16 %v291, %v290
  %v347 = vpack.c.b16 %v293, %v292
  %v348 = vpack.c.b16 %v295, %v294
  %v349 = vpack.c.b16 %v297, %v296
  %v350 = vpack.c.b16 %v299, %v298
  %v351 = vpack.c.b16 %v301, %v300
  %v352 = vpack.c.b16 %v303, %v302
  %v353 = vpack.c.b16 %v305, %v304
  %v354 = vpack.c.b16 %v307, %v306
  %v355 = vpack.c.b16 %v309, %v308
  %v356 = vpack.c.b16 %v311, %v310
  %v357 = vpack.c.b16 %v313, %v312
  %v358 = vpack.c.b16 %v315, %v314
  %v359 = vpack.c.b16 %v317, %v316
  %v360 = vpack.c.b16 %v319, %v318
  %v361 = vpack.c.b16 %v321, %v320
  %402 = vmatprep.subr.bf16.mxu0 0
  %403 = vmatpush1.bf16.msra.mxu0 %v322
  %404 = vmatprep.subr.bf16.mxu0 0
  %405 = vmatpush1.bf16.msra.mxu0 %v323
  %406 = vmatprep.subr.bf16.mxu0 0
  %407 = vmatpush1.bf16.msra.mxu0 %v324
  %408 = vmatprep.subr.bf16.mxu0 0
  %409 = vmatpush1.bf16.msra.mxu0 %v325
  %410 = vmatprep.subr.bf16.mxu0 0
  %411 = vmatpush1.bf16.msra.mxu0 %v326
  %412 = vmatprep.subr.bf16.mxu0 0
  %413 = vmatpush1.bf16.msra.mxu0 %v327
  %414 = vmatprep.subr.bf16.mxu0 0
  %415 = vmatpush1.bf16.msra.mxu0 %v328
  %416 = vmatprep.subr.bf16.mxu0 0
  %417 = vmatpush1.bf16.msra.mxu0 %v329
  %418 = vmatprep.subr.bf16.mxu0 0
  %419 = vmatpush1.bf16.msra.mxu0 %v330
  %420 = vmatprep.subr.bf16.mxu0 0
  %421 = vmatpush1.bf16.msra.mxu0 %v331
  %422 = vmatprep.subr.bf16.mxu0 0
  %423 = vmatpush1.bf16.msra.mxu0 %v332
  %424 = vmatprep.subr.bf16.mxu0 0
  %425 = vmatpush1.bf16.msra.mxu0 %v333
  %426 = vmatprep.subr.bf16.mxu0 0
  %427 = vmatpush1.bf16.msra.mxu0 %v334
  %428 = vmatprep.subr.bf16.mxu0 0
  %429 = vmatpush1.bf16.msra.mxu0 %v335
  %430 = vmatprep.subr.bf16.mxu0 0
  %431 = vmatpush1.bf16.msra.mxu0 %v336
  %432 = vmatprep.subr.bf16.mxu0 0
  %433 = vmatpush1.bf16.msra.mxu0 %v337
  %434 = vmatprep.mubr.bf16.mxu0 %v143
  %435 = vmatmul.mubr.bf16.gmra.mrb[0].mxu0 %v142
  %v436 = vpop.f32.mrb[0].mxu0
  %v437 = vadd.f32 0.0, %v436
  %v438 = vpop.f32.mrb[0].mxu0
  %v439 = vpop.f32.mrb[0].mxu0
  %v440 = vadd.f32 0.0, %v439
  %v441 = vpop.f32.mrb[0].mxu0
  %442 = vmatprep.mubr.bf16.mxu0 %v148
  %443 = vmatmul.mubr.bf16.gmra.mrb[0].mxu0 %v147
  %v444 = vpop.f32.mrb[0].mxu0
  %v445 = vadd.f32 0.0, %v444
  %v446 = vpop.f32.mrb[0].mxu0
  %v447 = vpop.f32.mrb[0].mxu0
  %v448 = vadd.f32 0.0, %v447
  %v449 = vpop.f32.mrb[0].mxu0
  %450 = vdwg.mxu0
  %451 = vmatprep.subr.bf16.mxu0 0
  %452 = vmatpush1.bf16.msra.mxu0 %v338
  %453 = vmatprep.subr.bf16.mxu0 0
  %454 = vmatpush1.bf16.msra.mxu0 %v339
  %455 = vmatprep.subr.bf16.mxu0 0
  %456 = vmatpush1.bf16.msra.mxu0 %v340
  %457 = vmatprep.subr.bf16.mxu0 0
  %458 = vmatpush1.bf16.msra.mxu0 %v341
  %459 = vmatprep.subr.bf16.mxu0 0
  %460 = vmatpush1.bf16.msra.mxu0 %v342
  %461 = vmatprep.subr.bf16.mxu0 0
  %462 = vmatpush1.bf16.msra.mxu0 %v343
  %463 = vmatprep.subr.bf16.mxu0 0
  %464 = vmatpush1.bf16.msra.mxu0 %v344
  %465 = vmatprep.subr.bf16.mxu0 0
  %466 = vmatpush1.bf16.msra.mxu0 %v345
  %467 = vmatprep.subr.bf16.mxu0 0
  %468 = vmatpush1.bf16.msra.mxu0 %v346
  %469 = vmatprep.subr.bf16.mxu0 0
  %470 = vmatpush1.bf16.msra.mxu0 %v347
  %471 = vmatprep.subr.bf16.mxu0 0
  %472 = vmatpush1.bf16.msra.mxu0 %v348
  %473 = vmatprep.subr.bf16.mxu0 0
  %474 = vmatpush1.bf16.msra.mxu0 %v349
  %475 = vmatprep.subr.bf16.mxu0 0
  %476 = vmatpush1.bf16.msra.mxu0 %v350
  %477 = vmatprep.subr.bf16.mxu0 0
  %478 = vmatpush1.bf16.msra.mxu0 %v351
  %479 = vmatprep.subr.bf16.mxu0 0
  %480 = vmatpush1.bf16.msra.mxu0 %v352
  %481 = vmatprep.subr.bf16.mxu0 0
  %482 = vmatpush1.bf16.msra.mxu0 %v353
  %483 = vmatprep.mubr.bf16.mxu0 %v145
  %484 = vmatmul.mubr.bf16.gmra.mrb[0].mxu0 %v144
  %v485 = vpop.f32.mrb[0].mxu0
  %v486 = vadd.f32 %v437, %v485
  %v487 = vpop.f32.mrb[0].mxu0
  %v488 = vpop.f32.mrb[0].mxu0
  %v489 = vadd.f32 %v440, %v488
  %v490 = vpop.f32.mrb[0].mxu0
  %491 = vmatprep.mubr.bf16.mxu0 %v150
  %492 = vmatmul.mubr.bf16.gmra.mrb[0].mxu0 %v149
  %v493 = vpop.f32.mrb[0].mxu0
  %v494 = vadd.f32 %v445, %v493
  %v495 = vpop.f32.mrb[0].mxu0
  %v496 = vpop.f32.mrb[0].mxu0
  %v497 = vadd.f32 %v448, %v496
  %v498 = vpop.f32.mrb[0].mxu0
  %499 = vdwg.mxu0
  %500 = vmatprep.subr.bf16.mxu0 0
  %501 = vmatpush1.bf16.msra.mxu0 %v354
  %502 = vmatprep.subr.bf16.mxu0 0
  %503 = vmatpush1.bf16.msra.mxu0 %v355
  %504 = vmatprep.subr.bf16.mxu0 0
  %505 = vmatpush1.bf16.msra.mxu0 %v356
  %506 = vmatprep.subr.bf16.mxu0 0
  %507 = vmatpush1.bf16.msra.mxu0 %v357
  %508 = vmatprep.subr.bf16.mxu0 0
  %509 = vmatpush1.bf16.msra.mxu0 %v358
  %510 = vmatprep.subr.bf16.mxu0 0
  %511 = vmatpush1.bf16.msra.mxu0 %v359
  %512 = vmatprep.subr.bf16.mxu0 0
  %513 = vmatpush1.bf16.msra.mxu0 %v360
  %514 = vmatprep.subr.bf16.mxu0 0
  %515 = vmatpush1.bf16.msra.mxu0 %v361
  %516 = vmatprep.subr.bf16.mxu0 0
  %517 = vmatpush1.bf16.msra.mxu0 0
  %518 = vmatprep.subr.bf16.mxu0 0
  %519 = vmatpush1.bf16.msra.mxu0 0
  %520 = vmatprep.subr.bf16.mxu0 0
  %521 = vmatpush1.bf16.msra.mxu0 0
  %522 = vmatprep.subr.bf16.mxu0 0
  %523 = vmatpush1.bf16.msra.mxu0 0
  %524 = vmatprep.subr.bf16.mxu0 0
  %525 = vmatpush1.bf16.msra.mxu0 0
  %526 = vmatprep.subr.bf16.mxu0 0
  %527 = vmatpush1.bf16.msra.mxu0 0
  %528 = vmatprep.subr.bf16.mxu0 0
  %529 = vmatpush1.bf16.msra.mxu0 0
  %530 = vmatprep.subr.bf16.mxu0 0
  %531 = vmatpush1.bf16.msra.mxu0 0
  %532 = vmatprep.mubr.bf16.mxu0 0
  %533 = vmatmul.mubr.bf16.gmra.mrb[0].mxu0 %v146
  %v534 = vpop.f32.mrb[0].mxu0
  %v535 = vadd.f32 %v486, %v534
  %v536 = vpop.f32.mrb[0].mxu0
  %v537 = vpop.f32.mrb[0].mxu0
  %v538 = vadd.f32 %v489, %v537
  %v539 = vpop.f32.mrb[0].mxu0
  %540 = vmatprep.mubr.bf16.mxu0 0
  %541 = vmatmul.mubr.bf16.gmra.mrb[0].mxu0 %v151
  %v542 = vpop.f32.mrb[0].mxu0
  %v543 = vadd.f32 %v494, %v542
  %v544 = vpop.f32.mrb[0].mxu0
  %v545 = vpop.f32.mrb[0].mxu0
  %v546 = vadd.f32 %v497, %v545
  %v547 = vpop.f32.mrb[0].mxu0
  %548 = vdwg.mxu0
  %v549 = vld [vmem:[%s2] sm:$0x1]
  %v551 = vlaneseq
  %v552 = vshrl.u32 %v551, 7
  %v553 = vsub.s32 0, %v552
  %v554 = vrot.slane %v549, %v553
  %v556 = vmul.f32 %v535, %v554
  %v557 = vmul.f32 %v538, %v554
  %v558 = vmul.f32 %v543, %v554
  %v559 = vmul.f32 %v546, %v554
  %v560 = vld [vmem:[%s3] sm:$0x1]
  %v562 = vlaneseq
  %v563 = vshrl.u32 %v562, 7
  %v564 = vsub.s32 0, %v563
  %v565 = vrot.slane %v560, %v564
  %v567 = vadd.f32 %v556, %v565
  %v568 = vadd.f32 %v557, %v565
  %v569 = vadd.f32 %v558, %v565
  %v570 = vadd.f32 %v559, %v565
  %v571 = vmax.f32 %v567, 0.0
  %v572 = vmax.f32 %v568, 0.0
  %v573 = vmax.f32 %v569, 0.0
  %v574 = vmax.f32 %v570, 0.0
  %v575 = vpack.c.bf16 %v572, %v571
  %v576 = vpack.c.bf16 %v574, %v573
  %v579 = vunpack.c.l.b16 %v575
  %v580 = vunpack.c.h.b16 %v575
  %v581 = vunpack.c.l.b16 %v576
  %v582 = vunpack.c.h.b16 %v576
  %v583 = vpack.c.b16 %v579, %v579
  %v584 = vpack.c.b16 %v580, %v580
  %v585 = vpack.c.b16 %v581, %v581
  %v586 = vpack.c.b16 %v582, %v582
  %591 = vst [vmem:[%s4] sm:$0xf] %v583
  %592 = vst [vmem:[%s4 + $0x4] sm:$0xf] %v584
  %593 = vst [vmem:[%s4 + $0x8] sm:$0xf] %v585
  %594 = vst [vmem:[%s4 + $0xc] sm:$0xf] %v586
  // Predicated region
  $region18: #{sde_net_forward.4} parent=0 // pred_check
    _
  $region19: #{sde_net_forward.4} parent=0 // pred_check_branch
    %596 = sbr.rel (0) target = $region21
  $region20: #{sde_net_forward.4} parent=0 // pred_region
    _
  $region21: #{sde_net_forward.4} parent=0 // pred_fallthru
    _
  // Predicated region
  $region22: #{sde_net_forward.4} parent=0 // pred_check
    _
  $region23: #{sde_net_forward.4} parent=0 // pred_check_branch
    %598 = sbr.rel (0) target = $region25
  $region24: #{sde_net_forward.4} parent=0 // pred_region
    _
  $region25: #{sde_net_forward.4} parent=0 // pred_fallthru
    _

// kernel: sde_net_forward.5
$region0: #{sde_net_forward.5}
  #allocation0 [shape = 'u32[]', space=smem, size = 0x4, offset = 0x4, fixed_abs, tag = 'smem constant byte address 0x4 - core index']
  #allocation1 [shape = 'u32[144,128]{1,0:T(1,128)}', space=vmem, size = 0x12000, scoped, tag = 'internal scratch']
  %s0 = inlined_call_operand.vmem [shape: bf16[8,4,128], index: 0, kind: input, shape index: {}]
  %s1 = inlined_call_operand.vmem [shape: bf16[128,128], index: 1, kind: input, shape index: {}]
  %s2 = inlined_call_operand.vmem [shape: f32[90,128], index: 2, kind: input, shape index: {}]
  %s3 = inlined_call_operand.vmem [shape: bf16[1,128,128], index: 3, kind: input, shape index: {}]
  %s4 = inlined_call_operand.vmem [shape: f32[1,1,128], index: 4, kind: input, shape index: {}]
  %s5 = inlined_call_operand.vmem [shape: bf16[128,128], index: 5, kind: input, shape index: {}]
  %s6 = inlined_call_operand.vmem [shape: f32[1,128], index: 6, kind: input, shape index: {}]
  %s7 = inlined_call_operand.vmem [shape: bf16[128,128], index: 7, kind: input, shape index: {}]
  %s8 = inlined_call_operand.vmem [shape: f32[1,128], index: 8, kind: input, shape index: {}]
  %s9 = inlined_call_operand.vmem [shape: f32[8,128], index: 9, kind: output, shape index: {}]
  %s10 = sld [smem:[#allocation0]]
  $region53: #{sde_net_forward.5} parent=0
    _
  %s12 = ssub.s32 1, %s10
  %s13 = scalar_select 0, %s12, %s10
  // Predicated region
  $region2: #{sde_net_forward.5} parent=0 // pred_check
    _
  $region3: #{sde_net_forward.5} parent=0 // pred_check_branch
    %15 = sbr.rel (0) target = $region5
  $region4: #{sde_net_forward.5} parent=0 // pred_region
    _
  $region5: #{sde_net_forward.5} parent=0 // pred_fallthru
    _
  // Predicated region
  $region6: #{sde_net_forward.5} parent=0 // pred_check
    _
  $region7: #{sde_net_forward.5} parent=0 // pred_check_branch
    %17 = sbr.rel (0) target = $region9
  $region8: #{sde_net_forward.5} parent=0 // pred_region
    _
  $region9: #{sde_net_forward.5} parent=0 // pred_fallthru
    _
  // Predicated region
  $region10: #{sde_net_forward.5} parent=0 // pred_check
    _
  $region11: #{sde_net_forward.5} parent=0 // pred_check_branch
    %19 = sbr.rel (0) target = $region13
  $region12: #{sde_net_forward.5} parent=0 // pred_region
    _
  $region13: #{sde_net_forward.5} parent=0 // pred_fallthru
    _
  // Predicated region
  $region14: #{sde_net_forward.5} parent=0 // pred_check
    _
  $region15: #{sde_net_forward.5} parent=0 // pred_check_branch
    %21 = sbr.rel (0) target = $region17
  $region16: #{sde_net_forward.5} parent=0 // pred_region
    _
  $region17: #{sde_net_forward.5} parent=0 // pred_fallthru
    _
  // Predicated region
  $region18: #{sde_net_forward.5} parent=0 // pred_check
    _
  $region19: #{sde_net_forward.5} parent=0 // pred_check_branch
    %23 = sbr.rel (0) target = $region21
  $region20: #{sde_net_forward.5} parent=0 // pred_region
    _
  $region21: #{sde_net_forward.5} parent=0 // pred_fallthru
    _
  // Predicated region
  $region22: #{sde_net_forward.5} parent=0 // pred_check
    _
  $region23: #{sde_net_forward.5} parent=0 // pred_check_branch
    %25 = sbr.rel (0) target = $region25
  $region24: #{sde_net_forward.5} parent=0 // pred_region
    _
  $region25: #{sde_net_forward.5} parent=0 // pred_fallthru
    _
  // Predicated region
  $region26: #{sde_net_forward.5} parent=0 // pred_check
    _
  $region27: #{sde_net_forward.5} parent=0 // pred_check_branch
    %27 = sbr.rel (0) target = $region29
  $region28: #{sde_net_forward.5} parent=0 // pred_region
    _
  $region29: #{sde_net_forward.5} parent=0 // pred_fallthru
    _
  // Predicated region
  $region30: #{sde_net_forward.5} parent=0 // pred_check
    _
  $region31: #{sde_net_forward.5} parent=0 // pred_check_branch
    %29 = sbr.rel (0) target = $region33
  $region32: #{sde_net_forward.5} parent=0 // pred_region
    _
  $region33: #{sde_net_forward.5} parent=0 // pred_fallthru
    _
  // Predicated region
  $region34: #{sde_net_forward.5} parent=0 // pred_check
    _
  $region35: #{sde_net_forward.5} parent=0 // pred_check_branch
    %31 = sbr.rel (0) target = $region37
  $region36: #{sde_net_forward.5} parent=0 // pred_region
    _
  $region37: #{sde_net_forward.5} parent=0 // pred_fallthru
    _
  %v33 = vld [vmem:[%s0] sm:$0x3]
  %v34 = vld [vmem:[%s0 + $0x2] sm:$0x3]
  %v35 = vld [vmem:[%s0 + $0x4] sm:$0x3]
  %v36 = vld [vmem:[%s0 + $0x6] sm:$0x3]
  %v37 = vld [vmem:[%s0 + $0x8] sm:$0x3]
  %v38 = vld [vmem:[%s0 + $0xa] sm:$0x3]
  %v39 = vld [vmem:[%s0 + $0xc] sm:$0x3]
  %v40 = vld [vmem:[%s0 + $0xe] sm:$0x3]
  %v41 = vunpack.c.l.bf16 %v33
  %v42 = vunpack.c.l.bf16 %v34
  %v43 = vunpack.c.l.bf16 %v35
  %v44 = vunpack.c.l.bf16 %v36
  %v45 = vunpack.c.l.bf16 %v37
  %v46 = vunpack.c.l.bf16 %v38
  %v47 = vunpack.c.l.bf16 %v39
  %v48 = vunpack.c.l.bf16 %v40
  %vm49 = vcmask 1043456
  %v50 = vsel %vm49, %v41, 0.0
  %v51 = vrot.slane %v50, 4
  %v52 = vadd.f32 %v50, %v51
  %v53 = vrot.slane %v52, 2
  %v54 = vadd.f32 %v52, %v53
  %v55 = vrot.slane %v54, 1
  %v56 = vadd.f32 %v54, %v55
  %v57 = vsel %vm49, %v42, 0.0
  %v58 = vrot.slane %v57, 4
  %v59 = vadd.f32 %v57, %v58
  %v60 = vrot.slane %v59, 2
  %v61 = vadd.f32 %v59, %v60
  %v62 = vrot.slane %v61, 1
  %v63 = vadd.f32 %v61, %v62
  %v64 = vsel %vm49, %v43, 0.0
  %v65 = vrot.slane %v64, 4
  %v66 = vadd.f32 %v64, %v65
  %v67 = vrot.slane %v66, 2
  %v68 = vadd.f32 %v66, %v67
  %v69 = vrot.slane %v68, 1
  %v70 = vadd.f32 %v68, %v69
  %v71 = vsel %vm49, %v44, 0.0
  %v72 = vrot.slane %v71, 4
  %v73 = vadd.f32 %v71, %v72
  %v74 = vrot.slane %v73, 2
  %v75 = vadd.f32 %v73, %v74
  %v76 = vrot.slane %v75, 1
  %v77 = vadd.f32 %v75, %v76
  %v78 = vsel %vm49, %v45, 0.0
  %v79 = vrot.slane %v78, 4
  %v80 = vadd.f32 %v78, %v79
  %v81 = vrot.slane %v80, 2
  %v82 = vadd.f32 %v80, %v81
  %v83 = vrot.slane %v82, 1
  %v84 = vadd.f32 %v82, %v83
  %v85 = vsel %vm49, %v46, 0.0
  %v86 = vrot.slane %v85, 4
  %v87 = vadd.f32 %v85, %v86
  %v88 = vrot.slane %v87, 2
  %v89 = vadd.f32 %v87, %v88
  %v90 = vrot.slane %v89, 1
  %v91 = vadd.f32 %v89, %v90
  %v92 = vsel %vm49, %v47, 0.0
  %v93 = vrot.slane %v92, 4
  %v94 = vadd.f32 %v92, %v93
  %v95 = vrot.slane %v94, 2
  %v96 = vadd.f32 %v94, %v95
  %v97 = vrot.slane %v96, 1
  %v98 = vadd.f32 %v96, %v97
  %v99 = vsel %vm49, %v48, 0.0
  %v100 = vrot.slane %v99, 4
  %v101 = vadd.f32 %v99, %v100
  %v102 = vrot.slane %v101, 2
  %v103 = vadd.f32 %v101, %v102
  %v104 = vrot.slane %v103, 1
  %v105 = vadd.f32 %v103, %v104
  %v106 = vrcp.pop 4.0
  %v107 = vmul.f32 %v56, %v106
  %v108 = vmul.f32 %v63, %v106
  %v109 = vmul.f32 %v70, %v106
  %v110 = vmul.f32 %v77, %v106
  %v111 = vmul.f32 %v84, %v106
  %v112 = vmul.f32 %v91, %v106
  %v113 = vmul.f32 %v98, %v106
  %v114 = vmul.f32 %v105, %v106
  loop: start=0, step=1, limit=30
  $region38: #{sde_net_forward.5} parent=0 // loop_pre_header
    _
  $region39: #{sde_net_forward.5} parent=0 // loop_header
    %s116 = sphi 0, %s120
    %p117 = scmp.ge.s32.totalorder %s116, 30
    %v121 = vphi %v107, %v925
    %v122 = vphi %v108, %v926
    %v123 = vphi %v109, %v927
    %v124 = vphi %v110, %v928
    %v125 = vphi %v111, %v929
    %v126 = vphi %v112, %v930
    %v127 = vphi %v113, %v931
    %v128 = vphi %v114, %v932
  $region40: #{sde_net_forward.5} parent=0 // loop_header_branch
    %119 = sbr.rel (%p117) target = $region44
  $region41: #{sde_net_forward.5} parent=0 // loop_body
    %s129 = smul.u32 %s116, 3
    %v130 = vpack.c.bf16 %v121, %v121
    %v131 = vpack.c.bf16 %v122, %v122
    %v132 = vpack.c.bf16 %v123, %v123
    %v133 = vpack.c.bf16 %v124, %v124
    %v134 = vpack.c.bf16 %v125, %v125
    %v135 = vpack.c.bf16 %v126, %v126
    %v136 = vpack.c.bf16 %v127, %v127
    %v137 = vpack.c.bf16 %v128, %v128
    %v138 = vld [vmem:[%s1] sm:$0xf]
    %v139 = vld [vmem:[%s1 + $0x4] sm:$0xf]
    %v140 = vld [vmem:[%s1 + $0x8] sm:$0xf]
    %v141 = vld [vmem:[%s1 + $0xc] sm:$0xf]
    %v142 = vld [vmem:[%s1 + $0x10] sm:$0xf]
    %v143 = vld [vmem:[%s1 + $0x14] sm:$0xf]
    %v144 = vld [vmem:[%s1 + $0x18] sm:$0xf]
    %v145 = vld [vmem:[%s1 + $0x1c] sm:$0xf]
    %v146 = vld [vmem:[%s1 + $0x20] sm:$0xf]
    %v147 = vld [vmem:[%s1 + $0x24] sm:$0xf]
    %v148 = vld [vmem:[%s1 + $0x28] sm:$0xf]
    %v149 = vld [vmem:[%s1 + $0x2c] sm:$0xf]
    %v150 = vld [vmem:[%s1 + $0x30] sm:$0xf]
    %v151 = vld [vmem:[%s1 + $0x34] sm:$0xf]
    %v152 = vld [vmem:[%s1 + $0x38] sm:$0xf]
    %v153 = vld [vmem:[%s1 + $0x3c] sm:$0xf]
    %s154 = scalar_lea.vmem %s2, %s129
    %v155 = vld [vmem:[%s154] sm:$0x1]
    %v156 = vlaneseq
    %v157 = vshrl.u32 %v156, 7
    %v158 = vsub.s32 0, %v157
    %v159 = vrot.slane %v155, %v158
    %v168 = vunpack.c.l.b16 %v130
    %v169 = vunpack.c.l.b16 %v131
    %v170 = vunpack.c.l.b16 %v132
    %v171 = vunpack.c.l.b16 %v133
    %v172 = vunpack.c.l.b16 %v134
    %v173 = vunpack.c.l.b16 %v135
    %v174 = vunpack.c.l.b16 %v136
    %v175 = vunpack.c.l.b16 %v137
    %v176 = vrot.slane %v169, 7
    %vm177 = vcmask 1041409
    %v178 = vsel %vm177, %v176, %v168
    %v179 = vrot.slane %v170, 6
    %vm180 = vcmask 1042434
    %v181 = vsel %vm180, %v179, %v178
    %v182 = vrot.slane %v171, 5
    %vm183 = vcmask 1043459
    %v184 = vsel %vm183, %v182, %v181
    %v185 = vrot.slane %v172, 4
    %vm186 = vcmask 1044484
    %v187 = vsel %vm186, %v185, %v184
    %v188 = vrot.slane %v173, 3
    %vm189 = vcmask 1045509
    %v190 = vsel %vm189, %v188, %v187
    %v191 = vrot.slane %v174, 2
    %vm192 = vcmask 1046534
    %v193 = vsel %vm192, %v191, %v190
    %v194 = vrot.slane %v175, 1
    %vm195 = vcmask 1047559
    %v196 = vsel %vm195, %v194, %v193
    %v197 = vpack.c.b16 %v196, %v196
    %v215 = vunpack.c.l.b16 %v138
    %v216 = vunpack.c.l.b16 %v139
    %v217 = vunpack.c.l.b16 %v140
    %v218 = vunpack.c.l.b16 %v141
    %v219 = vunpack.c.l.b16 %v142
    %v220 = vunpack.c.l.b16 %v143
    %v221 = vunpack.c.l.b16 %v144
    %v222 = vunpack.c.l.b16 %v145
    %v223 = vunpack.c.l.b16 %v146
    %v224 = vunpack.c.l.b16 %v147
    %v225 = vunpack.c.l.b16 %v148
    %v226 = vunpack.c.l.b16 %v149
    %v227 = vunpack.c.l.b16 %v150
    %v228 = vunpack.c.l.b16 %v151
    %v229 = vunpack.c.l.b16 %v152
    %v230 = vunpack.c.l.b16 %v153
    %v231 = vpack.c.b16 %v216, %v215
    %v232 = vpack.c.b16 %v218, %v217
    %v233 = vpack.c.b16 %v220, %v219
    %v234 = vpack.c.b16 %v222, %v221
    %v235 = vpack.c.b16 %v224, %v223
    %v236 = vpack.c.b16 %v226, %v225
    %v237 = vpack.c.b16 %v228, %v227
    %v238 = vpack.c.b16 %v230, %v229
    %247 = vmatprep.subr.bf16.mxu0 0
    %248 = vmatpush1.bf16.msra.mxu0 %v231
    %249 = vmatprep.subr.bf16.mxu0 0
    %250 = vmatpush1.bf16.msra.mxu0 %v232
    %251 = vmatprep.subr.bf16.mxu0 0
    %252 = vmatpush1.bf16.msra.mxu0 %v233
    %253 = vmatprep.subr.bf16.mxu0 0
    %254 = vmatpush1.bf16.msra.mxu0 %v234
    %255 = vmatprep.subr.bf16.mxu0 0
    %256 = vmatpush1.bf16.msra.mxu0 %v235
    %257 = vmatprep.subr.bf16.mxu0 0
    %258 = vmatpush1.bf16.msra.mxu0 %v236
    %259 = vmatprep.subr.bf16.mxu0 0
    %260 = vmatpush1.bf16.msra.mxu0 %v237
    %261 = vmatprep.subr.bf16.mxu0 0
    %262 = vmatpush1.bf16.msra.mxu0 %v238
    %263 = vmatprep.subr.bf16.mxu0 0
    %264 = vmatpush1.bf16.msra.mxu0 0
    %265 = vmatprep.subr.bf16.mxu0 0
    %266 = vmatpush1.bf16.msra.mxu0 0
    %267 = vmatprep.subr.bf16.mxu0 0
    %268 = vmatpush1.bf16.msra.mxu0 0
    %269 = vmatprep.subr.bf16.mxu0 0
    %270 = vmatpush1.bf16.msra.mxu0 0
    %271 = vmatprep.subr.bf16.mxu0 0
    %272 = vmatpush1.bf16.msra.mxu0 0
    %273 = vmatprep.subr.bf16.mxu0 0
    %274 = vmatpush1.bf16.msra.mxu0 0
    %275 = vmatprep.subr.bf16.mxu0 0
    %276 = vmatpush1.bf16.msra.mxu0 0
    %277 = vmatprep.subr.bf16.mxu0 0
    %278 = vmatpush1.bf16.msra.mxu0 0
    %279 = vmatprep.mubr.bf16.mxu0 0
    %280 = vmatmul.mubr.bf16.gmra.mrb[0].mxu0 %v197
    %v281 = vpop.f32.mrb[0].mxu0
    %v282 = vadd.f32 %v159, %v281
    %v283 = vpop.f32.mrb[0].mxu0
    %v284 = vpop.f32.mrb[0].mxu0
    %v285 = vpop.f32.mrb[0].mxu0
    %286 = vdwg.mxu0
    %v287 = vmax.f32 %v282, 0.0
    %v288 = vpack.c.bf16 %v287, %v287
    %v289 = vld [vmem:[%s3] sm:$0xf]
    %v290 = vld [vmem:[%s3 + $0x4] sm:$0xf]
    %v291 = vld [vmem:[%s3 + $0x8] sm:$0xf]
    %v292 = vld [vmem:[%s3 + $0xc] sm:$0xf]
    %v293 = vld [vmem:[%s3 + $0x10] sm:$0xf]
    %v294 = vld [vmem:[%s3 + $0x14] sm:$0xf]
    %v295 = vld [vmem:[%s3 + $0x18] sm:$0xf]
    %v296 = vld [vmem:[%s3 + $0x1c] sm:$0xf]
    %v297 = vld [vmem:[%s3 + $0x20] sm:$0xf]
    %v298 = vld [vmem:[%s3 + $0x24] sm:$0xf]
    %v299 = vld [vmem:[%s3 + $0x28] sm:$0xf]
    %v300 = vld [vmem:[%s3 + $0x2c] sm:$0xf]
    %v301 = vld [vmem:[%s3 + $0x30] sm:$0xf]
    %v302 = vld [vmem:[%s3 + $0x34] sm:$0xf]
    %v303 = vld [vmem:[%s3 + $0x38] sm:$0xf]
    %v304 = vld [vmem:[%s3 + $0x3c] sm:$0xf]
    %v305 = vld [vmem:[%s4] sm:$0x1]
    %v307 = vlaneseq
    %v308 = vshrl.u32 %v307, 7
    %v309 = vsub.s32 0, %v308
    %v310 = vrot.slane %v305, %v309
    %v328 = vunpack.c.l.b16 %v289
    %v329 = vunpack.c.l.b16 %v290
    %v330 = vunpack.c.l.b16 %v291
    %v331 = vunpack.c.l.b16 %v292
    %v332 = vunpack.c.l.b16 %v293
    %v333 = vunpack.c.l.b16 %v294
    %v334 = vunpack.c.l.b16 %v295
    %v335 = vunpack.c.l.b16 %v296
    %v336 = vunpack.c.l.b16 %v297
    %v337 = vunpack.c.l.b16 %v298
    %v338 = vunpack.c.l.b16 %v299
    %v339 = vunpack.c.l.b16 %v300
    %v340 = vunpack.c.l.b16 %v301
    %v341 = vunpack.c.l.b16 %v302
    %v342 = vunpack.c.l.b16 %v303
    %v343 = vunpack.c.l.b16 %v304
    %v344 = vpack.c.b16 %v329, %v328
    %v345 = vpack.c.b16 %v331, %v330
    %v346 = vpack.c.b16 %v333, %v332
    %v347 = vpack.c.b16 %v335, %v334
    %v348 = vpack.c.b16 %v337, %v336
    %v349 = vpack.c.b16 %v339, %v338
    %v350 = vpack.c.b16 %v341, %v340
    %v351 = vpack.c.b16 %v343, %v342
    %360 = vmatprep.subr.bf16.mxu0 0
    %361 = vmatpush1.bf16.msra.mxu0 %v344
    %362 = vmatprep.subr.bf16.mxu0 0
    %363 = vmatpush1.bf16.msra.mxu0 %v345
    %364 = vmatprep.subr.bf16.mxu0 0
    %365 = vmatpush1.bf16.msra.mxu0 %v346
    %366 = vmatprep.subr.bf16.mxu0 0
    %367 = vmatpush1.bf16.msra.mxu0 %v347
    %368 = vmatprep.subr.bf16.mxu0 0
    %369 = vmatpush1.bf16.msra.mxu0 %v348
    %370 = vmatprep.subr.bf16.mxu0 0
    %371 = vmatpush1.bf16.msra.mxu0 %v349
    %372 = vmatprep.subr.bf16.mxu0 0
    %373 = vmatpush1.bf16.msra.mxu0 %v350
    %374 = vmatprep.subr.bf16.mxu0 0
    %375 = vmatpush1.bf16.msra.mxu0 %v351
    %376 = vmatprep.subr.bf16.mxu0 0
    %377 = vmatpush1.bf16.msra.mxu0 0
    %378 = vmatprep.subr.bf16.mxu0 0
    %379 = vmatpush1.bf16.msra.mxu0 0
    %380 = vmatprep.subr.bf16.mxu0 0
    %381 = vmatpush1.bf16.msra.mxu0 0
    %382 = vmatprep.subr.bf16.mxu0 0
    %383 = vmatpush1.bf16.msra.mxu0 0
    %384 = vmatprep.subr.bf16.mxu0 0
    %385 = vmatpush1.bf16.msra.mxu0 0
    %386 = vmatprep.subr.bf16.mxu0 0
    %387 = vmatpush1.bf16.msra.mxu0 0
    %388 = vmatprep.subr.bf16.mxu0 0
    %389 = vmatpush1.bf16.msra.mxu0 0
    %390 = vmatprep.subr.bf16.mxu0 0
    %391 = vmatpush1.bf16.msra.mxu0 0
    %392 = vmatprep.mubr.bf16.mxu0 0
    %393 = vmatmul.mubr.bf16.gmra.mrb[0].mxu0 %v288
    %v394 = vpop.f32.mrb[0].mxu0
    %v395 = vadd.f32 %v310, %v394
    %v396 = vpop.f32.mrb[0].mxu0
    %v397 = vpop.f32.mrb[0].mxu0
    %v398 = vpop.f32.mrb[0].mxu0
    %399 = vdwg.mxu0
    %v400 = vmax.f32 %v395, 0.0
    %v401 = vpack.c.bf16 %v400, %v400
    %v402 = vld [vmem:[%s5] sm:$0xf]
    %v403 = vld [vmem:[%s5 + $0x4] sm:$0xf]
    %v404 = vld [vmem:[%s5 + $0x8] sm:$0xf]
    %v405 = vld [vmem:[%s5 + $0xc] sm:$0xf]
    %v406 = vld [vmem:[%s5 + $0x10] sm:$0xf]
    %v407 = vld [vmem:[%s5 + $0x14] sm:$0xf]
    %v408 = vld [vmem:[%s5 + $0x18] sm:$0xf]
    %v409 = vld [vmem:[%s5 + $0x1c] sm:$0xf]
    %v410 = vld [vmem:[%s5 + $0x20] sm:$0xf]
    %v411 = vld [vmem:[%s5 + $0x24] sm:$0xf]
    %v412 = vld [vmem:[%s5 + $0x28] sm:$0xf]
    %v413 = vld [vmem:[%s5 + $0x2c] sm:$0xf]
    %v414 = vld [vmem:[%s5 + $0x30] sm:$0xf]
    %v415 = vld [vmem:[%s5 + $0x34] sm:$0xf]
    %v416 = vld [vmem:[%s5 + $0x38] sm:$0xf]
    %v417 = vld [vmem:[%s5 + $0x3c] sm:$0xf]
    %v418 = vld [vmem:[%s6] sm:$0x1]
    %v420 = vlaneseq
    %v421 = vshrl.u32 %v420, 7
    %v422 = vsub.s32 0, %v421
    %v423 = vrot.slane %v418, %v422
    %v441 = vunpack.c.l.b16 %v402
    %v442 = vunpack.c.l.b16 %v403
    %v443 = vunpack.c.l.b16 %v404
    %v444 = vunpack.c.l.b16 %v405
    %v445 = vunpack.c.l.b16 %v406
    %v446 = vunpack.c.l.b16 %v407
    %v447 = vunpack.c.l.b16 %v408
    %v448 = vunpack.c.l.b16 %v409
    %v449 = vunpack.c.l.b16 %v410
    %v450 = vunpack.c.l.b16 %v411
    %v451 = vunpack.c.l.b16 %v412
    %v452 = vunpack.c.l.b16 %v413
    %v453 = vunpack.c.l.b16 %v414
    %v454 = vunpack.c.l.b16 %v415
    %v455 = vunpack.c.l.b16 %v416
    %v456 = vunpack.c.l.b16 %v417
    %v457 = vpack.c.b16 %v442, %v441
    %v458 = vpack.c.b16 %v444, %v443
    %v459 = vpack.c.b16 %v446, %v445
    %v460 = vpack.c.b16 %v448, %v447
    %v461 = vpack.c.b16 %v450, %v449
    %v462 = vpack.c.b16 %v452, %v451
    %v463 = vpack.c.b16 %v454, %v453
    %v464 = vpack.c.b16 %v456, %v455
    %473 = vmatprep.subr.bf16.mxu0 0
    %474 = vmatpush1.bf16.msra.mxu0 %v457
    %475 = vmatprep.subr.bf16.mxu0 0
    %476 = vmatpush1.bf16.msra.mxu0 %v458
    %477 = vmatprep.subr.bf16.mxu0 0
    %478 = vmatpush1.bf16.msra.mxu0 %v459
    %479 = vmatprep.subr.bf16.mxu0 0
    %480 = vmatpush1.bf16.msra.mxu0 %v460
    %481 = vmatprep.subr.bf16.mxu0 0
    %482 = vmatpush1.bf16.msra.mxu0 %v461
    %483 = vmatprep.subr.bf16.mxu0 0
    %484 = vmatpush1.bf16.msra.mxu0 %v462
    %485 = vmatprep.subr.bf16.mxu0 0
    %486 = vmatpush1.bf16.msra.mxu0 %v463
    %487 = vmatprep.subr.bf16.mxu0 0
    %488 = vmatpush1.bf16.msra.mxu0 %v464
    %489 = vmatprep.subr.bf16.mxu0 0
    %490 = vmatpush1.bf16.msra.mxu0 0
    %491 = vmatprep.subr.bf16.mxu0 0
    %492 = vmatpush1.bf16.msra.mxu0 0
    %493 = vmatprep.subr.bf16.mxu0 0
    %494 = vmatpush1.bf16.msra.mxu0 0
    %495 = vmatprep.subr.bf16.mxu0 0
    %496 = vmatpush1.bf16.msra.mxu0 0
    %497 = vmatprep.subr.bf16.mxu0 0
    %498 = vmatpush1.bf16.msra.mxu0 0
    %499 = vmatprep.subr.bf16.mxu0 0
    %500 = vmatpush1.bf16.msra.mxu0 0
    %501 = vmatprep.subr.bf16.mxu0 0
    %502 = vmatpush1.bf16.msra.mxu0 0
    %503 = vmatprep.subr.bf16.mxu0 0
    %504 = vmatpush1.bf16.msra.mxu0 0
    %505 = vmatprep.mubr.bf16.mxu0 0
    %506 = vmatmul.mubr.bf16.gmra.mrb[0].mxu0 %v401
    %v507 = vpop.f32.mrb[0].mxu0
    %v508 = vadd.f32 %v423, %v507
    %v509 = vpop.f32.mrb[0].mxu0
    %v510 = vpop.f32.mrb[0].mxu0
    %v511 = vpop.f32.mrb[0].mxu0
    %512 = vdwg.mxu0
    %v513 = vtanh.pop %v508
    %v514 = vmul.f32 %v513, 0.1
    %v516 = vrot.slane %v514, 1
    %v517 = vrot.slane %v514, 2
    %v518 = vrot.slane %v514, 3
    %v519 = vrot.slane %v514, 4
    %v520 = vrot.slane %v514, 5
    %v521 = vrot.slane %v514, 6
    %v522 = vrot.slane %v514, 7
    %v531 = vadd.f32 %v121, %v514
    %v532 = vadd.f32 %v122, %v516
    %v533 = vadd.f32 %v123, %v517
    %v534 = vadd.f32 %v124, %v518
    %v535 = vadd.f32 %v125, %v519
    %v536 = vadd.f32 %v126, %v520
    %v537 = vadd.f32 %v127, %v521
    %v538 = vadd.f32 %v128, %v522
    %s539 = sadd.s32 %s129, 1
    %v540 = vpack.c.bf16 %v531, %v531
    %v541 = vpack.c.bf16 %v532, %v532
    %v542 = vpack.c.bf16 %v533, %v533
    %v543 = vpack.c.bf16 %v534, %v534
    %v544 = vpack.c.bf16 %v535, %v535
    %v545 = vpack.c.bf16 %v536, %v536
    %v546 = vpack.c.bf16 %v537, %v537
    %v547 = vpack.c.bf16 %v538, %v538
    %s548 = scalar_lea.vmem %s2, %s539
    %v549 = vld [vmem:[%s548] sm:$0x1]
    %v550 = vlaneseq
    %v551 = vshrl.u32 %v550, 7
    %v552 = vsub.s32 0, %v551
    %v553 = vrot.slane %v549, %v552
    %v562 = vunpack.c.l.b16 %v540
    %v563 = vunpack.c.l.b16 %v541
    %v564 = vunpack.c.l.b16 %v542
    %v565 = vunpack.c.l.b16 %v543
    %v566 = vunpack.c.l.b16 %v544
    %v567 = vunpack.c.l.b16 %v545
    %v568 = vunpack.c.l.b16 %v546
    %v569 = vunpack.c.l.b16 %v547
    %v570 = vrot.slane %v563, 7
    %v571 = vsel %vm177, %v570, %v562
    %v572 = vrot.slane %v564, 6
    %v573 = vsel %vm180, %v572, %v571
    %v574 = vrot.slane %v565, 5
    %v575 = vsel %vm183, %v574, %v573
    %v576 = vrot.slane %v566, 4
    %v577 = vsel %vm186, %v576, %v575
    %v578 = vrot.slane %v567, 3
    %v579 = vsel %vm189, %v578, %v577
    %v580 = vrot.slane %v568, 2
    %v581 = vsel %vm192, %v580, %v579
    %v582 = vrot.slane %v569, 1
    %v583 = vsel %vm195, %v582, %v581
    %v584 = vpack.c.b16 %v583, %v583
    %586 = vmatprep.subr.bf16.mxu0 0
    %587 = vmatpush1.bf16.msra.mxu0 %v231
    %588 = vmatprep.subr.bf16.mxu0 0
    %589 = vmatpush1.bf16.msra.mxu0 %v232
    %590 = vmatprep.subr.bf16.mxu0 0
    %591 = vmatpush1.bf16.msra.mxu0 %v233
    %592 = vmatprep.subr.bf16.mxu0 0
    %593 = vmatpush1.bf16.msra.mxu0 %v234
    %594 = vmatprep.subr.bf16.mxu0 0
    %595 = vmatpush1.bf16.msra.mxu0 %v235
    %596 = vmatprep.subr.bf16.mxu0 0
    %597 = vmatpush1.bf16.msra.mxu0 %v236
    %598 = vmatprep.subr.bf16.mxu0 0
    %599 = vmatpush1.bf16.msra.mxu0 %v237
    %600 = vmatprep.subr.bf16.mxu0 0
    %601 = vmatpush1.bf16.msra.mxu0 %v238
    %602 = vmatprep.subr.bf16.mxu0 0
    %603 = vmatpush1.bf16.msra.mxu0 0
    %604 = vmatprep.subr.bf16.mxu0 0
    %605 = vmatpush1.bf16.msra.mxu0 0
    %606 = vmatprep.subr.bf16.mxu0 0
    %607 = vmatpush1.bf16.msra.mxu0 0
    %608 = vmatprep.subr.bf16.mxu0 0
    %609 = vmatpush1.bf16.msra.mxu0 0
    %610 = vmatprep.subr.bf16.mxu0 0
    %611 = vmatpush1.bf16.msra.mxu0 0
    %612 = vmatprep.subr.bf16.mxu0 0
    %613 = vmatpush1.bf16.msra.mxu0 0
    %614 = vmatprep.subr.bf16.mxu0 0
    %615 = vmatpush1.bf16.msra.mxu0 0
    %616 = vmatprep.subr.bf16.mxu0 0
    %617 = vmatpush1.bf16.msra.mxu0 0
    %618 = vmatprep.mubr.bf16.mxu0 0
    %619 = vmatmul.mubr.bf16.gmra.mrb[0].mxu0 %v584
    %v620 = vpop.f32.mrb[0].mxu0
    %v621 = vadd.f32 %v553, %v620
    %v622 = vpop.f32.mrb[0].mxu0
    %v623 = vpop.f32.mrb[0].mxu0
    %v624 = vpop.f32.mrb[0].mxu0
    %625 = vdwg.mxu0
    %v626 = vmax.f32 %v621, 0.0
    %v627 = vpack.c.bf16 %v626, %v626
    %628 = vmatprep.subr.bf16.mxu0 0
    %629 = vmatpush1.bf16.msra.mxu0 %v344
    %630 = vmatprep.subr.bf16.mxu0 0
    %631 = vmatpush1.bf16.msra.mxu0 %v345
    %632 = vmatprep.subr.bf16.mxu0 0
    %633 = vmatpush1.bf16.msra.mxu0 %v346
    %634 = vmatprep.subr.bf16.mxu0 0
    %635 = vmatpush1.bf16.msra.mxu0 %v347
    %636 = vmatprep.subr.bf16.mxu0 0
    %637 = vmatpush1.bf16.msra.mxu0 %v348
    %638 = vmatprep.subr.bf16.mxu0 0
    %639 = vmatpush1.bf16.msra.mxu0 %v349
    %640 = vmatprep.subr.bf16.mxu0 0
    %641 = vmatpush1.bf16.msra.mxu0 %v350
    %642 = vmatprep.subr.bf16.mxu0 0
    %643 = vmatpush1.bf16.msra.mxu0 %v351
    %644 = vmatprep.subr.bf16.mxu0 0
    %645 = vmatpush1.bf16.msra.mxu0 0
    %646 = vmatprep.subr.bf16.mxu0 0
    %647 = vmatpush1.bf16.msra.mxu0 0
    %648 = vmatprep.subr.bf16.mxu0 0
    %649 = vmatpush1.bf16.msra.mxu0 0
    %650 = vmatprep.subr.bf16.mxu0 0
    %651 = vmatpush1.bf16.msra.mxu0 0
    %652 = vmatprep.subr.bf16.mxu0 0
    %653 = vmatpush1.bf16.msra.mxu0 0
    %654 = vmatprep.subr.bf16.mxu0 0
    %655 = vmatpush1.bf16.msra.mxu0 0
    %656 = vmatprep.subr.bf16.mxu0 0
    %657 = vmatpush1.bf16.msra.mxu0 0
    %658 = vmatprep.subr.bf16.mxu0 0
    %659 = vmatpush1.bf16.msra.mxu0 0
    %660 = vmatprep.mubr.bf16.mxu0 0
    %661 = vmatmul.mubr.bf16.gmra.mrb[0].mxu0 %v627
    %v662 = vpop.f32.mrb[0].mxu0
    %v663 = vadd.f32 %v310, %v662
    %v664 = vpop.f32.mrb[0].mxu0
    %v665 = vpop.f32.mrb[0].mxu0
    %v666 = vpop.f32.mrb[0].mxu0
    %667 = vdwg.mxu0
    %v668 = vmax.f32 %v663, 0.0
    %v669 = vpack.c.bf16 %v668, %v668
    %670 = vmatprep.subr.bf16.mxu0 0
    %671 = vmatpush1.bf16.msra.mxu0 %v457
    %672 = vmatprep.subr.bf16.mxu0 0
    %673 = vmatpush1.bf16.msra.mxu0 %v458
    %674 = vmatprep.subr.bf16.mxu0 0
    %675 = vmatpush1.bf16.msra.mxu0 %v459
    %676 = vmatprep.subr.bf16.mxu0 0
    %677 = vmatpush1.bf16.msra.mxu0 %v460
    %678 = vmatprep.subr.bf16.mxu0 0
    %679 = vmatpush1.bf16.msra.mxu0 %v461
    %680 = vmatprep.subr.bf16.mxu0 0
    %681 = vmatpush1.bf16.msra.mxu0 %v462
    %682 = vmatprep.subr.bf16.mxu0 0
    %683 = vmatpush1.bf16.msra.mxu0 %v463
    %684 = vmatprep.subr.bf16.mxu0 0
    %685 = vmatpush1.bf16.msra.mxu0 %v464
    %686 = vmatprep.subr.bf16.mxu0 0
    %687 = vmatpush1.bf16.msra.mxu0 0
    %688 = vmatprep.subr.bf16.mxu0 0
    %689 = vmatpush1.bf16.msra.mxu0 0
    %690 = vmatprep.subr.bf16.mxu0 0
    %691 = vmatpush1.bf16.msra.mxu0 0
    %692 = vmatprep.subr.bf16.mxu0 0
    %693 = vmatpush1.bf16.msra.mxu0 0
    %694 = vmatprep.subr.bf16.mxu0 0
    %695 = vmatpush1.bf16.msra.mxu0 0
    %696 = vmatprep.subr.bf16.mxu0 0
    %697 = vmatpush1.bf16.msra.mxu0 0
    %698 = vmatprep.subr.bf16.mxu0 0
    %699 = vmatpush1.bf16.msra.mxu0 0
    %700 = vmatprep.subr.bf16.mxu0 0
    %701 = vmatpush1.bf16.msra.mxu0 0
    %702 = vmatprep.mubr.bf16.mxu0 0
    %703 = vmatmul.mubr.bf16.gmra.mrb[0].mxu0 %v669
    %v704 = vpop.f32.mrb[0].mxu0
    %v705 = vadd.f32 %v423, %v704
    %v706 = vpop.f32.mrb[0].mxu0
    %v707 = vpop.f32.mrb[0].mxu0
    %v708 = vpop.f32.mrb[0].mxu0
    %709 = vdwg.mxu0
    %v710 = vtanh.pop %v705
    %v711 = vmul.f32 %v710, 0.1
    %v713 = vrot.slane %v711, 1
    %v714 = vrot.slane %v711, 2
    %v715 = vrot.slane %v711, 3
    %v716 = vrot.slane %v711, 4
    %v717 = vrot.slane %v711, 5
    %v718 = vrot.slane %v711, 6
    %v719 = vrot.slane %v711, 7
    %v728 = vadd.f32 %v531, %v711
    %v729 = vadd.f32 %v532, %v713
    %v730 = vadd.f32 %v533, %v714
    %v731 = vadd.f32 %v534, %v715
    %v732 = vadd.f32 %v535, %v716
    %v733 = vadd.f32 %v536, %v717
    %v734 = vadd.f32 %v537, %v718
    %v735 = vadd.f32 %v538, %v719
    %s736 = sadd.s32 %s129, 2
    %v737 = vpack.c.bf16 %v728, %v728
    %v738 = vpack.c.bf16 %v729, %v729
    %v739 = vpack.c.bf16 %v730, %v730
    %v740 = vpack.c.bf16 %v731, %v731
    %v741 = vpack.c.bf16 %v732, %v732
    %v742 = vpack.c.bf16 %v733, %v733
    %v743 = vpack.c.bf16 %v734, %v734
    %v744 = vpack.c.bf16 %v735, %v735
    %s745 = scalar_lea.vmem %s2, %s736
    %v746 = vld [vmem:[%s745] sm:$0x1]
    %v747 = vlaneseq
    %v748 = vshrl.u32 %v747, 7
    %v749 = vsub.s32 0, %v748
    %v750 = vrot.slane %v746, %v749
    %v759 = vunpack.c.l.b16 %v737
    %v760 = vunpack.c.l.b16 %v738
    %v761 = vunpack.c.l.b16 %v739
    %v762 = vunpack.c.l.b16 %v740
    %v763 = vunpack.c.l.b16 %v741
    %v764 = vunpack.c.l.b16 %v742
    %v765 = vunpack.c.l.b16 %v743
    %v766 = vunpack.c.l.b16 %v744
    %v767 = vrot.slane %v760, 7
    %v768 = vsel %vm177, %v767, %v759
    %v769 = vrot.slane %v761, 6
    %v770 = vsel %vm180, %v769, %v768
    %v771 = vrot.slane %v762, 5
    %v772 = vsel %vm183, %v771, %v770
    %v773 = vrot.slane %v763, 4
    %v774 = vsel %vm186, %v773, %v772
    %v775 = vrot.slane %v764, 3
    %v776 = vsel %vm189, %v775, %v774
    %v777 = vrot.slane %v765, 2
    %v778 = vsel %vm192, %v777, %v776
    %v779 = vrot.slane %v766, 1
    %v780 = vsel %vm195, %v779, %v778
    %v781 = vpack.c.b16 %v780, %v780
    %783 = vmatprep.subr.bf16.mxu0 0
    %784 = vmatpush1.bf16.msra.mxu0 %v231
    %785 = vmatprep.subr.bf16.mxu0 0
    %786 = vmatpush1.bf16.msra.mxu0 %v232
    %787 = vmatprep.subr.bf16.mxu0 0
    %788 = vmatpush1.bf16.msra.mxu0 %v233
    %789 = vmatprep.subr.bf16.mxu0 0
    %790 = vmatpush1.bf16.msra.mxu0 %v234
    %791 = vmatprep.subr.bf16.mxu0 0
    %792 = vmatpush1.bf16.msra.mxu0 %v235
    %793 = vmatprep.subr.bf16.mxu0 0
    %794 = vmatpush1.bf16.msra.mxu0 %v236
    %795 = vmatprep.subr.bf16.mxu0 0
    %796 = vmatpush1.bf16.msra.mxu0 %v237
    %797 = vmatprep.subr.bf16.mxu0 0
    %798 = vmatpush1.bf16.msra.mxu0 %v238
    %799 = vmatprep.subr.bf16.mxu0 0
    %800 = vmatpush1.bf16.msra.mxu0 0
    %801 = vmatprep.subr.bf16.mxu0 0
    %802 = vmatpush1.bf16.msra.mxu0 0
    %803 = vmatprep.subr.bf16.mxu0 0
    %804 = vmatpush1.bf16.msra.mxu0 0
    %805 = vmatprep.subr.bf16.mxu0 0
    %806 = vmatpush1.bf16.msra.mxu0 0
    %807 = vmatprep.subr.bf16.mxu0 0
    %808 = vmatpush1.bf16.msra.mxu0 0
    %809 = vmatprep.subr.bf16.mxu0 0
    %810 = vmatpush1.bf16.msra.mxu0 0
    %811 = vmatprep.subr.bf16.mxu0 0
    %812 = vmatpush1.bf16.msra.mxu0 0
    %813 = vmatprep.subr.bf16.mxu0 0
    %814 = vmatpush1.bf16.msra.mxu0 0
    %815 = vmatprep.mubr.bf16.mxu0 0
    %816 = vmatmul.mubr.bf16.gmra.mrb[0].mxu0 %v781
    %v817 = vpop.f32.mrb[0].mxu0
    %v818 = vadd.f32 %v750, %v817
    %v819 = vpop.f32.mrb[0].mxu0
    %v820 = vpop.f32.mrb[0].mxu0
    %v821 = vpop.f32.mrb[0].mxu0
    %822 = vdwg.mxu0
    %v823 = vmax.f32 %v818, 0.0
    %v824 = vpack.c.bf16 %v823, %v823
    %825 = vmatprep.subr.bf16.mxu0 0
    %826 = vmatpush1.bf16.msra.mxu0 %v344
    %827 = vmatprep.subr.bf16.mxu0 0
    %828 = vmatpush1.bf16.msra.mxu0 %v345
    %829 = vmatprep.subr.bf16.mxu0 0
    %830 = vmatpush1.bf16.msra.mxu0 %v346
    %831 = vmatprep.subr.bf16.mxu0 0
    %832 = vmatpush1.bf16.msra.mxu0 %v347
    %833 = vmatprep.subr.bf16.mxu0 0
    %834 = vmatpush1.bf16.msra.mxu0 %v348
    %835 = vmatprep.subr.bf16.mxu0 0
    %836 = vmatpush1.bf16.msra.mxu0 %v349
    %837 = vmatprep.subr.bf16.mxu0 0
    %838 = vmatpush1.bf16.msra.mxu0 %v350
    %839 = vmatprep.subr.bf16.mxu0 0
    %840 = vmatpush1.bf16.msra.mxu0 %v351
    %841 = vmatprep.subr.bf16.mxu0 0
    %842 = vmatpush1.bf16.msra.mxu0 0
    %843 = vmatprep.subr.bf16.mxu0 0
    %844 = vmatpush1.bf16.msra.mxu0 0
    %845 = vmatprep.subr.bf16.mxu0 0
    %846 = vmatpush1.bf16.msra.mxu0 0
    %847 = vmatprep.subr.bf16.mxu0 0
    %848 = vmatpush1.bf16.msra.mxu0 0
    %849 = vmatprep.subr.bf16.mxu0 0
    %850 = vmatpush1.bf16.msra.mxu0 0
    %851 = vmatprep.subr.bf16.mxu0 0
    %852 = vmatpush1.bf16.msra.mxu0 0
    %853 = vmatprep.subr.bf16.mxu0 0
    %854 = vmatpush1.bf16.msra.mxu0 0
    %855 = vmatprep.subr.bf16.mxu0 0
    %856 = vmatpush1.bf16.msra.mxu0 0
    %857 = vmatprep.mubr.bf16.mxu0 0
    %858 = vmatmul.mubr.bf16.gmra.mrb[0].mxu0 %v824
    %v859 = vpop.f32.mrb[0].mxu0
    %v860 = vadd.f32 %v310, %v859
    %v861 = vpop.f32.mrb[0].mxu0
    %v862 = vpop.f32.mrb[0].mxu0
    %v863 = vpop.f32.mrb[0].mxu0
    %864 = vdwg.mxu0
    %v865 = vmax.f32 %v860, 0.0
    %v866 = vpack.c.bf16 %v865, %v865
    %867 = vmatprep.subr.bf16.mxu0 0
    %868 = vmatpush1.bf16.msra.mxu0 %v457
    %869 = vmatprep.subr.bf16.mxu0 0
    %870 = vmatpush1.bf16.msra.mxu0 %v458
    %871 = vmatprep.subr.bf16.mxu0 0
    %872 = vmatpush1.bf16.msra.mxu0 %v459
    %873 = vmatprep.subr.bf16.mxu0 0
    %874 = vmatpush1.bf16.msra.mxu0 %v460
    %875 = vmatprep.subr.bf16.mxu0 0
    %876 = vmatpush1.bf16.msra.mxu0 %v461
    %877 = vmatprep.subr.bf16.mxu0 0
    %878 = vmatpush1.bf16.msra.mxu0 %v462
    %879 = vmatprep.subr.bf16.mxu0 0
    %880 = vmatpush1.bf16.msra.mxu0 %v463
    %881 = vmatprep.subr.bf16.mxu0 0
    %882 = vmatpush1.bf16.msra.mxu0 %v464
    %883 = vmatprep.subr.bf16.mxu0 0
    %884 = vmatpush1.bf16.msra.mxu0 0
    %885 = vmatprep.subr.bf16.mxu0 0
    %886 = vmatpush1.bf16.msra.mxu0 0
    %887 = vmatprep.subr.bf16.mxu0 0
    %888 = vmatpush1.bf16.msra.mxu0 0
    %889 = vmatprep.subr.bf16.mxu0 0
    %890 = vmatpush1.bf16.msra.mxu0 0
    %891 = vmatprep.subr.bf16.mxu0 0
    %892 = vmatpush1.bf16.msra.mxu0 0
    %893 = vmatprep.subr.bf16.mxu0 0
    %894 = vmatpush1.bf16.msra.mxu0 0
    %895 = vmatprep.subr.bf16.mxu0 0
    %896 = vmatpush1.bf16.msra.mxu0 0
    %897 = vmatprep.subr.bf16.mxu0 0
    %898 = vmatpush1.bf16.msra.mxu0 0
    %899 = vmatprep.mubr.bf16.mxu0 0
    %900 = vmatmul.mubr.bf16.gmra.mrb[0].mxu0 %v866
    %v901 = vpop.f32.mrb[0].mxu0
    %v902 = vadd.f32 %v423, %v901
    %v903 = vpop.f32.mrb[0].mxu0
    %v904 = vpop.f32.mrb[0].mxu0
    %v905 = vpop.f32.mrb[0].mxu0
    %906 = vdwg.mxu0
    %v907 = vtanh.pop %v902
    %v908 = vmul.f32 %v907, 0.1
    %v910 = vrot.slane %v908, 1
    %v911 = vrot.slane %v908, 2
    %v912 = vrot.slane %v908, 3
    %v913 = vrot.slane %v908, 4
    %v914 = vrot.slane %v908, 5
    %v915 = vrot.slane %v908, 6
    %v916 = vrot.slane %v908, 7
    %v925 = vadd.f32 %v728, %v908
    %v926 = vadd.f32 %v729, %v910
    %v927 = vadd.f32 %v730, %v911
    %v928 = vadd.f32 %v731, %v912
    %v929 = vadd.f32 %v732, %v913
    %v930 = vadd.f32 %v733, %v914
    %v931 = vadd.f32 %v734, %v915
    %v932 = vadd.f32 %v735, %v916
  $region42: #{sde_net_forward.5} parent=0 // loop_footer
    %s120 = sadd.s32 1, %s116
  $region43: #{sde_net_forward.5} parent=0 // loop_footer_branch
    %115 = sbr.rel target = $region39
  $region44: #{sde_net_forward.5} parent=0 // loop_exit
    _
  %v933 = vpack.c.bf16 %v121, %v121
  %v934 = vpack.c.bf16 %v122, %v122
  %v935 = vpack.c.bf16 %v123, %v123
  %v936 = vpack.c.bf16 %v124, %v124
  %v937 = vpack.c.bf16 %v125, %v125
  %v938 = vpack.c.bf16 %v126, %v126
  %v939 = vpack.c.bf16 %v127, %v127
  %v940 = vpack.c.bf16 %v128, %v128
  %v941 = vld [vmem:[%s7] sm:$0xf]
  %v942 = vld [vmem:[%s7 + $0x4] sm:$0xf]
  %v943 = vld [vmem:[%s7 + $0x8] sm:$0xf]
  %v944 = vld [vmem:[%s7 + $0xc] sm:$0xf]
  %v945 = vld [vmem:[%s7 + $0x10] sm:$0xf]
  %v946 = vld [vmem:[%s7 + $0x14] sm:$0xf]
  %v947 = vld [vmem:[%s7 + $0x18] sm:$0xf]
  %v948 = vld [vmem:[%s7 + $0x1c] sm:$0xf]
  %v949 = vld [vmem:[%s7 + $0x20] sm:$0xf]
  %v950 = vld [vmem:[%s7 + $0x24] sm:$0xf]
  %v951 = vld [vmem:[%s7 + $0x28] sm:$0xf]
  %v952 = vld [vmem:[%s7 + $0x2c] sm:$0xf]
  %v953 = vld [vmem:[%s7 + $0x30] sm:$0xf]
  %v954 = vld [vmem:[%s7 + $0x34] sm:$0xf]
  %v955 = vld [vmem:[%s7 + $0x38] sm:$0xf]
  %v956 = vld [vmem:[%s7 + $0x3c] sm:$0xf]
  %v957 = vld [vmem:[%s8] sm:$0x1]
  %v959 = vlaneseq
  %v960 = vshrl.u32 %v959, 7
  %v961 = vsub.s32 0, %v960
  %v962 = vrot.slane %v957, %v961
  %v972 = vunpack.c.l.b16 %v933
  %v973 = vunpack.c.l.b16 %v934
  %v974 = vunpack.c.l.b16 %v935
  %v975 = vunpack.c.l.b16 %v936
  %v976 = vunpack.c.l.b16 %v937
  %v977 = vunpack.c.l.b16 %v938
  %v978 = vunpack.c.l.b16 %v939
  %v979 = vunpack.c.l.b16 %v940
  %v980 = vrot.slane %v973, 7
  %vm981 = vcmask 1041409
  %v982 = vsel %vm981, %v980, %v972
  %v983 = vrot.slane %v974, 6
  %vm984 = vcmask 1042434
  %v985 = vsel %vm984, %v983, %v982
  %v986 = vrot.slane %v975, 5
  %vm987 = vcmask 1043459
  %v988 = vsel %vm987, %v986, %v985
  %v989 = vrot.slane %v976, 4
  %vm990 = vcmask 1044484
  %v991 = vsel %vm990, %v989, %v988
  %v992 = vrot.slane %v977, 3
  %vm993 = vcmask 1045509
  %v994 = vsel %vm993, %v992, %v991
  %v995 = vrot.slane %v978, 2
  %vm996 = vcmask 1046534
  %v997 = vsel %vm996, %v995, %v994
  %v998 = vrot.slane %v979, 1
  %vm999 = vcmask 1047559
  %v1000 = vsel %vm999, %v998, %v997
  %v1001 = vpack.c.b16 %v1000, %v1000
  %v1019 = vunpack.c.l.b16 %v941
  %v1020 = vunpack.c.l.b16 %v942
  %v1021 = vunpack.c.l.b16 %v943
  %v1022 = vunpack.c.l.b16 %v944
  %v1023 = vunpack.c.l.b16 %v945
  %v1024 = vunpack.c.l.b16 %v946
  %v1025 = vunpack.c.l.b16 %v947
  %v1026 = vunpack.c.l.b16 %v948
  %v1027 = vunpack.c.l.b16 %v949
  %v1028 = vunpack.c.l.b16 %v950
  %v1029 = vunpack.c.l.b16 %v951
  %v1030 = vunpack.c.l.b16 %v952
  %v1031 = vunpack.c.l.b16 %v953
  %v1032 = vunpack.c.l.b16 %v954
  %v1033 = vunpack.c.l.b16 %v955
  %v1034 = vunpack.c.l.b16 %v956
  %v1035 = vpack.c.b16 %v1020, %v1019
  %v1036 = vpack.c.b16 %v1022, %v1021
  %v1037 = vpack.c.b16 %v1024, %v1023
  %v1038 = vpack.c.b16 %v1026, %v1025
  %v1039 = vpack.c.b16 %v1028, %v1027
  %v1040 = vpack.c.b16 %v1030, %v1029
  %v1041 = vpack.c.b16 %v1032, %v1031
  %v1042 = vpack.c.b16 %v1034, %v1033
  %1051 = vmatprep.subr.bf16.mxu0 0
  %1052 = vmatpush1.bf16.msra.mxu0 %v1035
  %1053 = vmatprep.subr.bf16.mxu0 0
  %1054 = vmatpush1.bf16.msra.mxu0 %v1036
  %1055 = vmatprep.subr.bf16.mxu0 0
  %1056 = vmatpush1.bf16.msra.mxu0 %v1037
  %1057 = vmatprep.subr.bf16.mxu0 0
  %1058 = vmatpush1.bf16.msra.mxu0 %v1038
  %1059 = vmatprep.subr.bf16.mxu0 0
  %1060 = vmatpush1.bf16.msra.mxu0 %v1039
  %1061 = vmatprep.subr.bf16.mxu0 0
  %1062 = vmatpush1.bf16.msra.mxu0 %v1040
  %1063 = vmatprep.subr.bf16.mxu0 0
  %1064 = vmatpush1.bf16.msra.mxu0 %v1041
  %1065 = vmatprep.subr.bf16.mxu0 0
  %1066 = vmatpush1.bf16.msra.mxu0 %v1042
  %1067 = vmatprep.subr.bf16.mxu0 0
  %1068 = vmatpush1.bf16.msra.mxu0 0
  %1069 = vmatprep.subr.bf16.mxu0 0
  %1070 = vmatpush1.bf16.msra.mxu0 0
  %1071 = vmatprep.subr.bf16.mxu0 0
  %1072 = vmatpush1.bf16.msra.mxu0 0
  %1073 = vmatprep.subr.bf16.mxu0 0
  %1074 = vmatpush1.bf16.msra.mxu0 0
  %1075 = vmatprep.subr.bf16.mxu0 0
  %1076 = vmatpush1.bf16.msra.mxu0 0
  %1077 = vmatprep.subr.bf16.mxu0 0
  %1078 = vmatpush1.bf16.msra.mxu0 0
  %1079 = vmatprep.subr.bf16.mxu0 0
  %1080 = vmatpush1.bf16.msra.mxu0 0
  %1081 = vmatprep.subr.bf16.mxu0 0
  %1082 = vmatpush1.bf16.msra.mxu0 0
  %1083 = vmatprep.mubr.bf16.mxu0 0
  %1084 = vmatmul.mubr.bf16.gmra.mrb[0].mxu0 %v1001
  %v1085 = vpop.f32.mrb[0].mxu0
  %v1086 = vadd.f32 %v962, %v1085
  %v1087 = vpop.f32.mrb[0].mxu0
  %v1088 = vpop.f32.mrb[0].mxu0
  %v1089 = vpop.f32.mrb[0].mxu0
  %1090 = vdwg.mxu0
  %1091 = vst [vmem:[%s9] sm:$0xff] %v1086
  // Predicated region
  $region45: #{sde_net_forward.5} parent=0 // pred_check
    _
  $region46: #{sde_net_forward.5} parent=0 // pred_check_branch
    %1093 = sbr.rel (0) target = $region48
  $region47: #{sde_net_forward.5} parent=0 // pred_region
    _
  $region48: #{sde_net_forward.5} parent=0 // pred_fallthru
    _
  // Predicated region
  $region49: #{sde_net_forward.5} parent=0 // pred_check
    _
  $region50: #{sde_net_forward.5} parent=0 // pred_check_branch
    %1095 = sbr.rel (0) target = $region52
  $region51: #{sde_net_forward.5} parent=0 // pred_region
    _
  $region52: #{sde_net_forward.5} parent=0 // pred_fallthru
    _

</llo_original>
